<compile_context>
chip_gen: v7x
topology: tpu7x:2x2x1
jax: 0.10.0
libtpu: 0.0.40
codegen_flags: <defaults>
</compile_context>

<pallas_src>
import jax
import jax.numpy as jnp
import numpy as np
from jax.experimental import pallas as pl
from jax.experimental.pallas import tpu as pltpu


def _round_up(x, m):
    return ((x + m - 1) // m) * m


# ----------------------------- Pallas kernel ---------------------------------
def _linearized_context_kernel(
    # per-row-tile inputs (block index depends on grid axis i only)
    fmap_ref,    # [blk, F]    bf16
    logit_ref,   # [blk, C]    f32
    box_ref,     # [blk, 4]    f32
    # resident parameters (constant block index)
    wp_ref,      # [4, P]      f32   pos path: center_size + BN folded into Linear
    bp_ref,      # [1, P]      f32
    bd_ref,      # [1, Cp]     f32   decoder bias (lane padded)
    # H-tiled parameters (block index depends on grid axis j)
    wff_ref,     # [F, tn]     bf16  fusion weight rows for fmap   (BN folded)
    wfe_ref,     # [C, tn]     bf16  W_embed folded into fusion weight rows
    wfp_ref,     # [P, tn]     bf16  fusion weight rows for pos
    bf_ref,      # [1, tn]     f32   fusion bias (BN folded)
    wd_ref,      # [tn, Cp]    bf16  decoder weight rows for this H tile
    # outputs
    dists_ref,   # [blk, Cp]   f32   resident over j -> accumulated in place
    rep_ref,     # [blk, tn]   bf16
    # scratch (persist across the j sweep of a row tile)
    probs_sc,    # [blk, C]    bf16  hoisted softmax(logits)
    pos_sc,      # [blk, P]    bf16  hoisted positional embedding
):
    f32 = jnp.float32
    j = pl.program_id(1)

    @pl.when(j == 0)
    def _():
        # --- hoisted per-row-tile work: softmax + pos embedding ---------------
        logits = logit_ref[...].astype(f32)
        mx = jnp.max(logits, axis=1, keepdims=True)
        ex = jnp.exp(logits - mx)
        probs = ex * pl.reciprocal(jnp.sum(ex, axis=1, keepdims=True), approx=True)
        probs_sc[...] = probs.astype(probs_sc.dtype)

        pos = jnp.maximum(
            jnp.dot(box_ref[...].astype(f32), wp_ref[...],
                    preferred_element_type=f32) + bp_ref[...], 0.0)
        pos_sc[...] = pos.astype(pos_sc.dtype)

        # --- init the resident decoder accumulator with the bias --------------
        dists_ref[...] = jnp.broadcast_to(bd_ref[...], dists_ref.shape)

    # --- fusion (BN + W_embed folded into weights), one tile of the H axis ----
    rep = (
        jnp.dot(fmap_ref[...], wff_ref[...], preferred_element_type=f32)
        + jnp.dot(probs_sc[...], wfe_ref[...], preferred_element_type=f32)
        + jnp.dot(pos_sc[...], wfp_ref[...], preferred_element_type=f32)
        + bf_ref[...]
    )
    rep = jnp.maximum(rep, 0.0)                                   # [blk, tn] f32
    rep_ref[...] = rep.astype(rep_ref.dtype)                      # bf16 writeback

    # --- decoder: accumulate this H tile's contribution into the output -------
    dists_ref[...] += jnp.dot(rep.astype(wd_ref.dtype), wd_ref[...],
                              preferred_element_type=f32)


# ------------------------------- wrapper --------------------------------------
def linearized_context_forward(obj_fmaps, obj_logits, box_priors, params, *,
                               blk=512, tn=1024, weight_dtype=jnp.bfloat16,
                               vmem_limit_bytes=None):
    """Fused LinearizedContext forward (sgcls/eval path) as one Pallas kernel.

    tn < H  : H-tiled weight streaming (v7x-safe).
    tn == H : fusion/decoder weights effectively VMEM-resident (v6e/v5e; raise
              vmem_limit_bytes accordingly at real model dims).
    """
    N, F = obj_fmaps.shape
    C = obj_logits.shape[1]
    E = params["w_embed"].shape[1]
    P = params["w_pos"].shape[1]
    H = params["w_fus"].shape[1]
    eps = 1e-5
    f32 = jnp.float32

    # ---- row tile: MXU-sized for big problems, clipped for small ones;
    #      make sure the parallel i axis has >= 2 tiles (v7x megacore) ---------
    blk = min(blk, _round_up(N, 16))
    if _round_up(N, blk) // blk < 2 and blk >= 32:
        blk = _round_up((N + 1) // 2, 16)
    n_pad = _round_up(N, blk)

    # ---- H tile -----------------------------------------------------------------
    if tn >= H or H % tn != 0 or tn % 128 != 0:
        tn = H                                   # small H (or resident path)
    c_pad = _round_up(C, 128)                    # lane-dense decoder output

    # ---- fold eval-mode BatchNorm1d into per-feature affine -------------------
    def fold_bn(gamma, beta, mean, var):
        scale = gamma / jnp.sqrt(var + eps)
        return scale, beta - mean * scale

    pos_scale, pos_shift = fold_bn(params["pos_bn_gamma"], params["pos_bn_beta"],
                                   params["pos_bn_mean"], params["pos_bn_var"])
    fus_scale, fus_shift = fold_bn(params["fus_bn_gamma"], params["fus_bn_beta"],
                                   params["fus_bn_mean"], params["fus_bn_var"])

    # ---- pos path: fold center_size affine + BN into the Linear ---------------
    # center_size(boxes) == boxes @ M4 + offs, boxes = (x1, y1, x2, y2)
    m4 = jnp.array([[0.5, 0.0, -1.0, 0.0],
                    [0.0, 0.5, 0.0, -1.0],
                    [0.5, 0.0, 1.0, 0.0],
                    [0.0, 0.5, 0.0, 1.0]], f32)
    offs = jnp.array([0.5, 0.5, 1.0, 1.0], f32)
    w_pos_eff = (m4 * pos_scale[None, :]) @ params["w_pos"]                  # [4, P]
    b_pos_eff = (offs * pos_scale + pos_shift) @ params["w_pos"] + params["b_pos"]

    # ---- fusion path: fold BN scale into weight rows; fold W_embed entirely ---
    w_fus = params["w_fus"].astype(f32)
    wff = (w_fus[:F] * fus_scale[:F, None]).astype(weight_dtype)             # [F, H]
    wfe = (params["w_embed"].astype(f32)
           @ (w_fus[F:F + E] * fus_scale[F:F + E, None])).astype(weight_dtype)  # [C, H]
    wfp = (w_fus[F + E:] * fus_scale[F + E:, None]).astype(weight_dtype)     # [P, H]
    b_fus_eff = params["b_fus"] + fus_shift @ w_fus                          # [H]

    # ---- decoder: pad the class axis to a lane-dense multiple of 128 ----------
    w_dec = jnp.pad(params["w_dec"].astype(f32),
                    ((0, 0), (0, c_pad - C))).astype(weight_dtype)
    b_dec = jnp.pad(params["b_dec"].astype(f32), (0, c_pad - C))

    # ---- cast matmul operands to bf16 (f32 accumulation on the MXU) -----------
    fmap = obj_fmaps.astype(weight_dtype)
    logits = obj_logits.astype(f32)
    boxes = box_priors.astype(f32)

    # ---- pad the row axis to the row tile --------------------------------------
    if n_pad > N:
        pad = ((0, n_pad - N), (0, 0))
        fmap = jnp.pad(fmap, pad)
        logits = jnp.pad(logits, pad)
        boxes = jnp.pad(boxes, pad)

    grid = (n_pad // blk, H // tn)

    row_spec = lambda d: pl.BlockSpec((blk, d), lambda i, j: (i, 0))
    const_spec = lambda shape: pl.BlockSpec(shape, lambda i, j: (0, 0))

    in_specs = [
        row_spec(F), row_spec(C), row_spec(4),
        const_spec((4, P)),                                   # w_pos_eff
        const_spec((1, P)),                                   # b_pos_eff
        const_spec((1, c_pad)),                               # b_dec
        pl.BlockSpec((F, tn), lambda i, j: (0, j)),           # wff
        pl.BlockSpec((C, tn), lambda i, j: (0, j)),           # wfe (embed folded)
        pl.BlockSpec((P, tn), lambda i, j: (0, j)),           # wfp
        pl.BlockSpec((1, tn), lambda i, j: (0, j)),           # b_fus
        pl.BlockSpec((tn, c_pad), lambda i, j: (j, 0)),       # w_dec
    ]
    out_specs = (
        pl.BlockSpec((blk, c_pad), lambda i, j: (i, 0)),      # dists (acc over j)
        pl.BlockSpec((blk, tn), lambda i, j: (i, j)),         # obj_pre_rep (bf16)
    )

    # ---- advisory cost estimate for XLA's scheduler ----------------------------
    flops = (2 * n_pad * (F + C + P) * H          # fusion matmuls
             + 2 * n_pad * H * c_pad              # decoder matmul
             + 2 * n_pad * 4 * P)                 # pos matmul
    bytes_accessed = (n_pad * F * 2 + n_pad * C * 4 + n_pad * 4 * 4     # row inputs
                      + (F + C + P) * H * 2 + H * c_pad * 2             # weights
                      + n_pad * c_pad * 4 + n_pad * H * 2)              # outputs
    cost = pl.CostEstimate(flops=int(flops), transcendentals=int(n_pad * C),
                           bytes_accessed=int(bytes_accessed))

    dists, rep = pl.pallas_call(
        _linearized_context_kernel,
        out_shape=(
            jax.ShapeDtypeStruct((n_pad, c_pad), f32),
            jax.ShapeDtypeStruct((n_pad, H), jnp.bfloat16),
        ),
        grid=grid,
        in_specs=in_specs,
        out_specs=out_specs,
        scratch_shapes=[
            pltpu.VMEM((blk, C), jnp.bfloat16),    # hoisted softmax probs
            pltpu.VMEM((blk, P), jnp.bfloat16),    # hoisted pos embedding
        ],
        compiler_params=pltpu.CompilerParams(
            dimension_semantics=("parallel", "arbitrary"),
            vmem_limit_bytes=vmem_limit_bytes),
        cost_estimate=cost,
    )(fmap, logits, boxes, w_pos_eff, b_pos_eff[None, :],
      b_dec[None, :], wff, wfe, wfp, b_fus_eff[None, :], w_dec)

    obj_dists2 = dists[:N, :C]
    obj_pre_rep = rep[:N]
    # obj_preds = argmax(obj_dists2[:, 1:]) + 1 (exclude background col 0).
    # Done in the wrapper so the kernel only emits lane-dense stores.
    obj_preds = jnp.argmax(obj_dists2[:, 1:], axis=1) + 1
    return obj_dists2, obj_preds, obj_pre_rep


# --------------------------- pure-JAX reference --------------------------------
def reference_forward(obj_fmaps, obj_logits, box_priors, params):
    eps = 1e-5
    probs = jax.nn.softmax(obj_logits, axis=1)
    obj_embed = probs @ params["w_embed"]

    wh = box_priors[:, 2:4] - box_priors[:, 0:2] + 1.0
    ctr = box_priors[:, 0:2] + 0.5 * wh
    cs = jnp.concatenate([ctr, wh], axis=1)
    pos_in = ((cs - params["pos_bn_mean"]) / jnp.sqrt(params["pos_bn_var"] + eps)
              * params["pos_bn_gamma"] + params["pos_bn_beta"])
    pos = jax.nn.relu(pos_in @ params["w_pos"] + params["b_pos"])

    fused = jnp.concatenate([obj_fmaps, obj_embed, pos], axis=1)
    fin = ((fused - params["fus_bn_mean"]) / jnp.sqrt(params["fus_bn_var"] + eps)
           * params["fus_bn_gamma"] + params["fus_bn_beta"])
    rep = jax.nn.relu(fin @ params["w_fus"] + params["b_fus"])

    dists = rep @ params["w_dec"] + params["b_dec"]
    preds = jnp.argmax(dists[:, 1:], axis=1) + 1
    return dists, preds, rep


# ----------------------------------- main --------------------------------------
if __name__ == "__main__":
    # Small synthetic dims standing in for (4096, 200, 128, num_classes, 4096).
    # H is a multiple of tn=128 so the H-tiled accumulation path is exercised,
    # and N=32 is split into two row tiles (>=2 parallel tiles).
    N, F, C, E, P, H = 32, 64, 8, 32, 16, 256   # H == decoder input width

    key = jax.random.PRNGKey(0)
    ks = jax.random.split(key, 16)

    obj_fmaps = jax.random.normal(ks[0], (N, F), jnp.float32)
    obj_logits = jax.random.normal(ks[1], (N, C), jnp.float32)
    x1y1 = jax.random.uniform(ks[2], (N, 2), jnp.float32, 0.0, 50.0)
    wh = jax.random.uniform(ks[3], (N, 2), jnp.float32, 1.0, 30.0)
    box_priors = jnp.concatenate([x1y1, x1y1 + wh], axis=1)

    D = F + E + P
    params = {
        "w_embed": 0.1 * jax.random.normal(ks[4], (C, E), jnp.float32),
        "pos_bn_gamma": 1.0 + 0.1 * jax.random.normal(ks[5], (4,), jnp.float32),
        "pos_bn_beta": 0.1 * jax.random.normal(ks[6], (4,), jnp.float32),
        "pos_bn_mean": 0.1 * jax.random.normal(ks[7], (4,), jnp.float32),
        "pos_bn_var": 1.0 + 0.1 * jnp.abs(jax.random.normal(ks[8], (4,), jnp.float32)),
        "w_pos": 0.1 * jax.random.normal(ks[9], (4, P), jnp.float32),
        "b_pos": 0.1 * jax.random.normal(ks[10], (P,), jnp.float32),
        "fus_bn_gamma": 1.0 + 0.1 * jax.random.normal(ks[11], (D,), jnp.float32),
        "fus_bn_beta": 0.1 * jax.random.normal(ks[12], (D,), jnp.float32),
        "fus_bn_mean": 0.1 * jax.random.normal(ks[13], (D,), jnp.float32),
        "fus_bn_var": 1.0 + 0.1 * jnp.abs(jax.random.normal(ks[14], (D,), jnp.float32)),
        "w_fus": 0.05 * jax.random.normal(ks[15], (D, H), jnp.float32),
        "b_fus": jnp.zeros((H,), jnp.float32),
        "w_dec": 0.1 * jax.random.normal(jax.random.PRNGKey(42), (H, C), jnp.float32),
        "b_dec": jnp.zeros((C,), jnp.float32),
    }

    obj_dists2, obj_preds, obj_pre_rep = jax.block_until_ready(
        linearized_context_forward(obj_fmaps, obj_logits, box_priors, params,
                                   tn=128))

    ref_dists, ref_preds, ref_rep = reference_forward(
        obj_fmaps, obj_logits, box_priors, params)

    # bf16 weights/activations/rep output (f32 accumulation) -> loose tolerances.
    np.testing.assert_allclose(np.asarray(obj_dists2, dtype=np.float32),
                               np.asarray(ref_dists), rtol=5e-2, atol=5e-2)
    np.testing.assert_allclose(np.asarray(obj_pre_rep.astype(jnp.float32)),
                               np.asarray(ref_rep), rtol=5e-2, atol=5e-2)

    kp = np.asarray(obj_preds)
    rp = np.asarray(ref_preds)
    mism = kp != rp
    if np.any(mism):
        rd = np.asarray(ref_dists)
        gaps = np.abs(rd[np.arange(N), kp] - rd[np.arange(N), rp])
        assert np.all(gaps[mism] < 5e-2), "argmax mismatch beyond bf16 near-tie"

    print("KERNEL_OK")
</pallas_src>

<mosaic_0001>
module attributes {stable_mosaic.version = 11 : i64} {
  func.func @_linearized_context_kernel(%arg0: i32, %arg1: i32, %arg2: memref<16x64xbf16, #tpu.memory_space<vmem>>, %arg3: memref<16x8xf32, #tpu.memory_space<vmem>>, %arg4: memref<16x4xf32, #tpu.memory_space<vmem>>, %arg5: memref<4x16xf32, #tpu.memory_space<vmem>>, %arg6: memref<1x16xf32, #tpu.memory_space<vmem>>, %arg7: memref<1x128xf32, #tpu.memory_space<vmem>>, %arg8: memref<64x128xbf16, #tpu.memory_space<vmem>>, %arg9: memref<8x128xbf16, #tpu.memory_space<vmem>>, %arg10: memref<16x128xbf16, #tpu.memory_space<vmem>>, %arg11: memref<1x128xf32, #tpu.memory_space<vmem>>, %arg12: memref<128x128xbf16, #tpu.memory_space<vmem>>, %arg13: memref<16x128xf32, #tpu.memory_space<vmem>>, %arg14: memref<16x128xbf16, #tpu.memory_space<vmem>>, %arg15: memref<16x8xbf16, #tpu.memory_space<vmem>>, %arg16: memref<16x16xbf16, #tpu.memory_space<vmem>>) attributes {dimension_semantics = [#tpu.dimension_semantics<parallel>, #tpu.dimension_semantics<arbitrary>], iteration_bounds = array<i64: 2, 2>, scalar_prefetch = 0 : i64, scratch_operands = 2 : i64, tpu.core_type = #tpu.core_type<tc>, window_params = [{transform_indices = @transform_0, window_bounds = array<i64: 16, 64>}, {transform_indices = @transform_1, window_bounds = array<i64: 16, 8>}, {transform_indices = @transform_2, window_bounds = array<i64: 16, 4>}, {pipeline_mode = #tpu.pipeline_mode<synchronous>, transform_indices = @transform_3, window_bounds = array<i64: 4, 16>}, {pipeline_mode = #tpu.pipeline_mode<synchronous>, transform_indices = @transform_4, window_bounds = array<i64: 1, 16>}, {pipeline_mode = #tpu.pipeline_mode<synchronous>, transform_indices = @transform_5, window_bounds = array<i64: 1, 128>}, {transform_indices = @transform_6, window_bounds = array<i64: 64, 128>}, {transform_indices = @transform_7, window_bounds = array<i64: 8, 128>}, {transform_indices = @transform_8, window_bounds = array<i64: 16, 128>}, {transform_indices = @transform_9, window_bounds = array<i64: 1, 128>}, {transform_indices = @transform_10, window_bounds = array<i64: 128, 128>}, {transform_indices = @transform_11, window_bounds = array<i64: 16, 128>}, {transform_indices = @transform_12, window_bounds = array<i64: 16, 128>}]} {
    %c0_i32 = arith.constant 0 : i32
    %0 = arith.cmpi eq, %arg1, %c0_i32 : i32
    %1 = arith.extui %0 : i1 to i32
    %c0_i32_0 = arith.constant 0 : i32
    %2 = arith.cmpi ne, %1, %c0_i32_0 : i32
    scf.if %2 {
      %c0_26 = arith.constant 0 : index
      %c0_27 = arith.constant 0 : index
      %27 = vector.load %arg3[%c0_26, %c0_27] : memref<16x8xf32, #tpu.memory_space<vmem>>, vector<16x8xf32>
      %cst_28 = arith.constant dense<0xFF800000> : vector<16xf32>
      %28 = vector.multi_reduction <maximumf>, %27, %cst_28 [1] : vector<16x8xf32> to vector<16xf32>
      %29 = vector.shape_cast %28 : vector<16xf32> to vector<16x1xf32>
      %30 = vector.broadcast %29 : vector<16x1xf32> to vector<16x8xf32>
      %31 = arith.subf %27, %30 : vector<16x8xf32>
      %32 = math.exp %31 : vector<16x8xf32>
      %cst_29 = arith.constant dense<0.000000e+00> : vector<16xf32>
      %33 = vector.multi_reduction <add>, %32, %cst_29 [1] : vector<16x8xf32> to vector<16xf32>
      %34 = vector.shape_cast %33 : vector<16xf32> to vector<16x1xf32>
      %35 = tpu.reciprocal %34 {approx = true} : vector<16x1xf32> -> vector<16x1xf32>
      %36 = vector.broadcast %35 : vector<16x1xf32> to vector<16x8xf32>
      %37 = arith.mulf %32, %36 : vector<16x8xf32>
      %38 = arith.truncf %37 : vector<16x8xf32> to vector<16x8xbf16>
      %c0_30 = arith.constant 0 : index
      %c0_31 = arith.constant 0 : index
      %39 = vector.load %arg15[%c0_30, %c0_31] : memref<16x8xbf16, #tpu.memory_space<vmem>>, vector<16x8xbf16>
      tpu.vector_store %arg15[%c0_30, %c0_31], %38 {strides = array<i32>} : memref<16x8xbf16, #tpu.memory_space<vmem>>, vector<16x8xbf16>,
      %c0_32 = arith.constant 0 : index
      %c0_33 = arith.constant 0 : index
      %40 = vector.load %arg4[%c0_32, %c0_33] : memref<16x4xf32, #tpu.memory_space<vmem>>, vector<16x4xf32>
      %c0_34 = arith.constant 0 : index
      %c0_35 = arith.constant 0 : index
      %41 = vector.load %arg5[%c0_34, %c0_35] : memref<4x16xf32, #tpu.memory_space<vmem>>, vector<4x16xf32>
      %cst_36 = arith.constant dense<0.000000e+00> : vector<16x16xf32>
      %42 = tpu.matmul %40, %41, %cst_36 {dimension_numbers = #tpu.dot_dimension_numbers<[1], [0], [0], [1], [0, 0, 1, 1], [], []>} : vector<16x4xf32>, vector<4x16xf32>, vector<16x16xf32> -> vector<16x16xf32>
      %c0_37 = arith.constant 0 : index
      %c0_38 = arith.constant 0 : index
      %43 = vector.load %arg6[%c0_37, %c0_38] : memref<1x16xf32, #tpu.memory_space<vmem>>, vector<1x16xf32>
      %44 = vector.broadcast %43 : vector<1x16xf32> to vector<16x16xf32>
      %45 = arith.addf %42, %44 : vector<16x16xf32>
      %cst_39 = arith.constant 0.000000e+00 : f32
      %46 = vector.broadcast %cst_39 : f32 to vector<16x16xf32>
      %47 = arith.maximumf %45, %46 : vector<16x16xf32>
      %48 = arith.truncf %47 : vector<16x16xf32> to vector<16x16xbf16>
      %c0_40 = arith.constant 0 : index
      %c0_41 = arith.constant 0 : index
      %49 = vector.load %arg16[%c0_40, %c0_41] : memref<16x16xbf16, #tpu.memory_space<vmem>>, vector<16x16xbf16>
      tpu.vector_store %arg16[%c0_40, %c0_41], %48 {strides = array<i32>} : memref<16x16xbf16, #tpu.memory_space<vmem>>, vector<16x16xbf16>,
      %c0_42 = arith.constant 0 : index
      %c0_43 = arith.constant 0 : index
      %50 = vector.load %arg7[%c0_42, %c0_43] : memref<1x128xf32, #tpu.memory_space<vmem>>, vector<1x128xf32>
      %51 = vector.shape_cast %50 : vector<1x128xf32> to vector<1x128xf32>
      %52 = vector.broadcast %51 : vector<1x128xf32> to vector<16x128xf32>
      %c0_44 = arith.constant 0 : index
      %c0_45 = arith.constant 0 : index
      %53 = vector.load %arg13[%c0_44, %c0_45] : memref<16x128xf32, #tpu.memory_space<vmem>>, vector<16x128xf32>
      tpu.vector_store %arg13[%c0_44, %c0_45], %52 {strides = array<i32>} : memref<16x128xf32, #tpu.memory_space<vmem>>, vector<16x128xf32>,
    } else {
    }
    %c0 = arith.constant 0 : index
    %c0_1 = arith.constant 0 : index
    %3 = vector.load %arg2[%c0, %c0_1] : memref<16x64xbf16, #tpu.memory_space<vmem>>, vector<16x64xbf16>
    %c0_2 = arith.constant 0 : index
    %c0_3 = arith.constant 0 : index
    %4 = vector.load %arg8[%c0_2, %c0_3] : memref<64x128xbf16, #tpu.memory_space<vmem>>, vector<64x128xbf16>
    %cst = arith.constant dense<0.000000e+00> : vector<16x128xf32>
    %5 = tpu.matmul %3, %4, %cst {dimension_numbers = #tpu.dot_dimension_numbers<[1], [0], [0], [1], [0, 0, 1, 1], [], []>} : vector<16x64xbf16>, vector<64x128xbf16>, vector<16x128xf32> -> vector<16x128xf32>
    %c0_4 = arith.constant 0 : index
    %c0_5 = arith.constant 0 : index
    %6 = vector.load %arg15[%c0_4, %c0_5] : memref<16x8xbf16, #tpu.memory_space<vmem>>, vector<16x8xbf16>
    %c0_6 = arith.constant 0 : index
    %c0_7 = arith.constant 0 : index
    %7 = vector.load %arg9[%c0_6, %c0_7] : memref<8x128xbf16, #tpu.memory_space<vmem>>, vector<8x128xbf16>
    %cst_8 = arith.constant dense<0.000000e+00> : vector<16x128xf32>
    %8 = tpu.matmul %6, %7, %cst_8 {dimension_numbers = #tpu.dot_dimension_numbers<[1], [0], [0], [1], [0, 0, 1, 1], [], []>} : vector<16x8xbf16>, vector<8x128xbf16>, vector<16x128xf32> -> vector<16x128xf32>
    %9 = arith.addf %5, %8 : vector<16x128xf32>
    %c0_9 = arith.constant 0 : index
    %c0_10 = arith.constant 0 : index
    %10 = vector.load %arg16[%c0_9, %c0_10] : memref<16x16xbf16, #tpu.memory_space<vmem>>, vector<16x16xbf16>
    %c0_11 = arith.constant 0 : index
    %c0_12 = arith.constant 0 : index
    %11 = vector.load %arg10[%c0_11, %c0_12] : memref<16x128xbf16, #tpu.memory_space<vmem>>, vector<16x128xbf16>
    %cst_13 = arith.constant dense<0.000000e+00> : vector<16x128xf32>
    %12 = tpu.matmul %10, %11, %cst_13 {dimension_numbers = #tpu.dot_dimension_numbers<[1], [0], [0], [1], [0, 0, 1, 1], [], []>} : vector<16x16xbf16>, vector<16x128xbf16>, vector<16x128xf32> -> vector<16x128xf32>
    %13 = arith.addf %9, %12 : vector<16x128xf32>
    %c0_14 = arith.constant 0 : index
    %c0_15 = arith.constant 0 : index
    %14 = vector.load %arg11[%c0_14, %c0_15] : memref<1x128xf32, #tpu.memory_space<vmem>>, vector<1x128xf32>
    %15 = vector.broadcast %14 : vector<1x128xf32> to vector<16x128xf32>
    %16 = arith.addf %13, %15 : vector<16x128xf32>
    %cst_16 = arith.constant 0.000000e+00 : f32
    %17 = vector.broadcast %cst_16 : f32 to vector<16x128xf32>
    %18 = arith.maximumf %16, %17 : vector<16x128xf32>
    %19 = arith.truncf %18 : vector<16x128xf32> to vector<16x128xbf16>
    %c0_17 = arith.constant 0 : index
    %c0_18 = arith.constant 0 : index
    %20 = vector.load %arg14[%c0_17, %c0_18] : memref<16x128xbf16, #tpu.memory_space<vmem>>, vector<16x128xbf16>
    tpu.vector_store %arg14[%c0_17, %c0_18], %19 {strides = array<i32>} : memref<16x128xbf16, #tpu.memory_space<vmem>>, vector<16x128xbf16>,
    %c0_19 = arith.constant 0 : index
    %c0_20 = arith.constant 0 : index
    %21 = vector.load %arg13[%c0_19, %c0_20] : memref<16x128xf32, #tpu.memory_space<vmem>>, vector<16x128xf32>
    %22 = arith.truncf %18 : vector<16x128xf32> to vector<16x128xbf16>
    %c0_21 = arith.constant 0 : index
    %c0_22 = arith.constant 0 : index
    %23 = vector.load %arg12[%c0_21, %c0_22] : memref<128x128xbf16, #tpu.memory_space<vmem>>, vector<128x128xbf16>
    %cst_23 = arith.constant dense<0.000000e+00> : vector<16x128xf32>
    %24 = tpu.matmul %22, %23, %cst_23 {dimension_numbers = #tpu.dot_dimension_numbers<[1], [0], [0], [1], [0, 0, 1, 1], [], []>} : vector<16x128xbf16>, vector<128x128xbf16>, vector<16x128xf32> -> vector<16x128xf32>
    %25 = arith.addf %21, %24 : vector<16x128xf32>
    %c0_24 = arith.constant 0 : index
    %c0_25 = arith.constant 0 : index
    %26 = vector.load %arg13[%c0_24, %c0_25] : memref<16x128xf32, #tpu.memory_space<vmem>>, vector<16x128xf32>
    tpu.vector_store %arg13[%c0_24, %c0_25], %25 {strides = array<i32>} : memref<16x128xf32, #tpu.memory_space<vmem>>, vector<16x128xf32>,
    return
  }
  func.func @transform_0(%arg0: i32, %arg1: i32) -> (i32, i32) {
    %c0_i32 = arith.constant 0 : i32
    %c0_i32_0 = arith.constant 0 : i32
    return %arg0, %c0_i32 : i32, i32
  }
  func.func @transform_1(%arg0: i32, %arg1: i32) -> (i32, i32) {
    %c0_i32 = arith.constant 0 : i32
    %c0_i32_0 = arith.constant 0 : i32
    return %arg0, %c0_i32 : i32, i32
  }
  func.func @transform_2(%arg0: i32, %arg1: i32) -> (i32, i32) {
    %c0_i32 = arith.constant 0 : i32
    %c0_i32_0 = arith.constant 0 : i32
    return %arg0, %c0_i32 : i32, i32
  }
  func.func @transform_3(%arg0: i32, %arg1: i32) -> (i32, i32) {
    %c0_i32 = arith.constant 0 : i32
    %c0_i32_0 = arith.constant 0 : i32
    %c0_i32_1 = arith.constant 0 : i32
    return %c0_i32, %c0_i32_0 : i32, i32
  }
  func.func @transform_4(%arg0: i32, %arg1: i32) -> (i32, i32) {
    %c0_i32 = arith.constant 0 : i32
    %c0_i32_0 = arith.constant 0 : i32
    %c0_i32_1 = arith.constant 0 : i32
    return %c0_i32, %c0_i32_0 : i32, i32
  }
  func.func @transform_5(%arg0: i32, %arg1: i32) -> (i32, i32) {
    %c0_i32 = arith.constant 0 : i32
    %c0_i32_0 = arith.constant 0 : i32
    %c0_i32_1 = arith.constant 0 : i32
    return %c0_i32, %c0_i32_0 : i32, i32
  }
  func.func @transform_6(%arg0: i32, %arg1: i32) -> (i32, i32) {
    %c0_i32 = arith.constant 0 : i32
    %c0_i32_0 = arith.constant 0 : i32
    return %c0_i32, %arg1 : i32, i32
  }
  func.func @transform_7(%arg0: i32, %arg1: i32) -> (i32, i32) {
    %c0_i32 = arith.constant 0 : i32
    %c0_i32_0 = arith.constant 0 : i32
    return %c0_i32, %arg1 : i32, i32
  }
  func.func @transform_8(%arg0: i32, %arg1: i32) -> (i32, i32) {
    %c0_i32 = arith.constant 0 : i32
    %c0_i32_0 = arith.constant 0 : i32
    return %c0_i32, %arg1 : i32, i32
  }
  func.func @transform_9(%arg0: i32, %arg1: i32) -> (i32, i32) {
    %c0_i32 = arith.constant 0 : i32
    %c0_i32_0 = arith.constant 0 : i32
    return %c0_i32, %arg1 : i32, i32
  }
  func.func @transform_10(%arg0: i32, %arg1: i32) -> (i32, i32) {
    %c0_i32 = arith.constant 0 : i32
    %c0_i32_0 = arith.constant 0 : i32
    return %arg1, %c0_i32 : i32, i32
  }
  func.func @transform_11(%arg0: i32, %arg1: i32) -> (i32, i32) {
    %c0_i32 = arith.constant 0 : i32
    %c0_i32_0 = arith.constant 0 : i32
    return %arg0, %c0_i32 : i32, i32
  }
  func.func @transform_12(%arg0: i32, %arg1: i32) -> (i32, i32) {
    %c0_i32 = arith.constant 0 : i32
    return %arg0, %arg1 : i32, i32
  }
}

</mosaic_0001>

<llo_original>
// kernel: tpu_custom_call.1
$region0: #{tpu_custom_call.1}
  #allocation0 [shape = 'u32[]', space=smem, size = 0x4, offset = 0x4, fixed_abs, tag = 'smem constant byte address 0x4 - core index']
  #allocation1 [shape = 'u32[144,128]{1,0:T(1,128)}', space=vmem, size = 0x12000, scoped, tag = 'internal scratch']
  #allocation2 [shape = 'bf16[16,8]{1,0:T(16,128)(2,1)}', space=vmem, size = 0x1000, scoped, tag = 'scratch operand']
  #allocation3 [shape = 'bf16[16,16]{1,0:T(16,128)(2,1)}', space=vmem, size = 0x1000, scoped, tag = 'scratch operand']
  %s0 = inlined_call_operand.vmem [shape: bf16[32,64], index: 0, kind: input, shape index: {}]
  %s1 = inlined_call_operand.vmem [shape: f32[32,8], index: 1, kind: input, shape index: {}]
  %s2 = inlined_call_operand.vmem [shape: f32[32,4], index: 2, kind: input, shape index: {}]
  %s3 = inlined_call_operand.hbm [shape: f32[4,16], index: 3, kind: input, shape index: {}]
  %s4 = inlined_call_operand.hbm [shape: f32[1,16], index: 4, kind: input, shape index: {}]
  %s5 = inlined_call_operand.hbm [shape: f32[1,128], index: 5, kind: input, shape index: {}]
  %s6 = inlined_call_operand.vmem [shape: bf16[64,256], index: 6, kind: input, shape index: {}]
  %s7 = inlined_call_operand.hbm [shape: bf16[8,256], index: 7, kind: input, shape index: {}]
  %s8 = inlined_call_operand.vmem [shape: bf16[16,256], index: 8, kind: input, shape index: {}]
  %s9 = inlined_call_operand.vmem [shape: f32[1,256], index: 9, kind: input, shape index: {}]
  %s10 = inlined_call_operand.hbm [shape: bf16[256,128], index: 10, kind: input, shape index: {}]
  %s11 = inlined_call_operand.hbm [shape: f32[32,128], index: 11, kind: output, shape index: {0}]
  %s12 = inlined_call_operand.hbm [shape: bf16[32,256], index: 12, kind: output, shape index: {1}]
  %13 = xla_tuple %s11, %s12
  %s14 = sld [smem:[#allocation0]]
  $region191: #{tpu_custom_call.1} parent=0
    _
  %s16 = ssub.s32 1, %s14
  %s17 = scalar_select 0, %s16, %s14
  $region1: #{tpu_custom_call.1} parent=0
    #allocation4 [shape = 'u8[2048]{0}', space=vmem, size = 0x800, scoped, tag = 'input window, operand 3, single buffered']
    #allocation5 [shape = 's32[2]{0}', space=sflag, size = 0x8, scoped, tag = 'scoped memory for tpu_custom_call.1']
    #allocation6 [shape = 's32[2]{0}', space=sflag, size = 0x8, scoped, tag = 'scoped memory for tpu_custom_call.1']
    #allocation7 [shape = 'u8[512]{0}', space=vmem, size = 0x400, scoped, tag = 'input window, operand 4, single buffered']
    #allocation8 [shape = 's32[1]{0}', space=sflag, size = 0x4, scoped, tag = 'scoped memory for tpu_custom_call.1']
    #allocation9 [shape = 'u8[512]{0}', space=vmem, size = 0x400, scoped, tag = 'input window, operand 5, single buffered']
    #allocation10 [shape = 'u8[32768]{0}', space=vmem, size = 0x8000, scoped, tag = 'input window, operand 6']
    #allocation11 [shape = 'u8[4096]{0}', space=vmem, size = 0x1000, scoped, tag = 'input window, operand 7']
    #allocation12 [shape = 's32[2]{0}', space=sflag, size = 0x8, scoped, tag = 'scoped memory for tpu_custom_call.1']
    #allocation13 [shape = 'u8[8192]{0}', space=vmem, size = 0x2000, scoped, tag = 'input window, operand 8']
    #allocation14 [shape = 'u8[65536]{0}', space=vmem, size = 0x10000, scoped, tag = 'input window, operand 10']
    #allocation15 [shape = 'u8[16384]{0}', space=vmem, size = 0x4000, scoped, tag = 'output window, operand 0']
    #allocation16 [shape = 'u8[8192]{0}', space=vmem, size = 0x2000, scoped, tag = 'output window, operand 1']
    #allocation17 [shape = 's32[2]{0}', space=sflag, size = 0x8, scoped, tag = 'scoped memory for tpu_custom_call.1']
    %18 = vsyncpa [#allocation5], 0
    %19 = vsyncpa [#allocation8], 0
    %20 = vsyncpa [#allocation12], 0
    %s21 = scalar_lea.sflag [#allocation12], 1
    %22 = vsyncpa %s21, 0
    %23 = vsyncpa [#allocation6], 0
    %s24 = scalar_lea.sflag [#allocation6], 1
    %25 = vsyncpa %s24, 0
    %26 = vsyncpa [#allocation17], 0
    %s27 = scalar_lea.sflag [#allocation17], 1
    %28 = vsyncpa %s27, 0
    loop: start=0, step=1, limit=6
    $region2: #{tpu_custom_call.1} parent=1 // loop_pre_header
      _
    $region3: #{tpu_custom_call.1} parent=1 // loop_header
      %s30 = sphi 0, %s34
      %p31 = scmp.ge.s32.totalorder %s30, 6
      %s37 = sphi 0, %s49
      %s38 = sphi 0, %s45
      %s39 = sphi 0, %s37
      %s40 = sphi 0, %s38
      %s41 = sphi 0, %s39
      %s42 = sphi 0, %s40
      %s52 = sphi 0, %s54
      %s55 = sphi 0, %s52
      %s56 = sphi 0, %s55
      %s72 = sphi 0, %s56
      %s78 = sphi 0, %s80
      %s81 = sphi 0, %s78
      %s82 = sphi 0, %s81
      %s98 = sphi 0, %s82
      %s104 = sphi 0, %s106
      %s107 = sphi 0, %s104
      %s108 = sphi 0, %s107
      %s124 = sphi 0, %s108
      %s128 = sphi 0, %s128
      %s130 = sphi 0, %s128
      %s131 = sphi 0, %s130
      %s145 = sphi 0, %s131
      %s149 = sphi 0, %s149
      %s151 = sphi 0, %s149
      %s152 = sphi 0, %s151
      %s166 = sphi 0, %s152
      %s170 = sphi 0, %s170
      %s172 = sphi 0, %s170
      %s173 = sphi 0, %s172
      %s187 = sphi 0, %s173
      %s193 = sphi 0, %s195
      %s196 = sphi 0, %s193
      %s197 = sphi 0, %s196
      %s213 = sphi 0, %s197
      %s219 = sphi 0, %s221
      %s222 = sphi 0, %s219
      %s223 = sphi 0, %s222
      %s239 = sphi 0, %s223
      %s245 = sphi 0, %s247
      %s248 = sphi 0, %s245
      %s249 = sphi 0, %s248
      %s265 = sphi 0, %s249
      %s271 = sphi 0, %s273
      %s274 = sphi 0, %s271
      %s275 = sphi 0, %s274
      %s291 = sphi 0, %s275
      %s297 = sphi 0, %s299
      %s300 = sphi 0, %s297
      %s301 = sphi 0, %s300
      %s317 = sphi 0, %s301
      %s323 = sphi 0, %s325
      %s326 = sphi 0, %s323
      %s327 = sphi 0, %s326
      %s343 = sphi 0, %s327
      %s351 = sphi 0, %s353
      %s354 = sphi 0, %s351
      %s355 = sphi 0, %s354
      %s371 = sphi 0, %s355
    $region4: #{tpu_custom_call.1} parent=1 // loop_header_branch
      %33 = sbr.rel (%p31) target = $region8
    $region5: #{tpu_custom_call.1} parent=1 // loop_body
      %s35 = ssub.s32 %s30, 1
      %s36 = ssub.s32 %s30, 2
      %s43 = sadd.s32 1, %s38
      %p44 = scmp.ge.s32.totalorder %s43, 2
      %s45 = scalar_select %p44, 0, %s43
      %s46 = sadd.s32 1, %s37
      %s47 = scalar_select %p44, %s46, %s37
      %p48 = scmp.ge.s32.totalorder %s47, 2
      %s49 = scalar_select %p48, 0, %s47
      %s50 = ssub.s32 %s37, %s49
      %p51 = scmp.eq.s32.totalorder %s50, 0
      %s53 = sadd.s32 %s52, 1
      %s54 = scalar_select %p51, %s52, %s53
      %p57 = pneg %p51
      %p58 = scmp.eq.s32.totalorder %s30, 3
      %p59 = por %p57, %p58
      %p60 = scmp.ne.s32.totalorder %s52, %s55
      %p61 = scmp.eq.s32.totalorder %s30, 0
      %p62 = por %p60, %p61
      %p63 = scmp.ne.s32.totalorder %s52, %s55
      %p64 = scmp.eq.s32.totalorder %s35, 3
      %p65 = por %p63, %p64
      %p66 = scmp.ne.s32.totalorder %s55, %s56
      %p67 = scmp.eq.s32.totalorder %s35, 0
      %p68 = por %p66, %p67
      %p69 = scmp.ne.s32.totalorder %s55, %s56
      %p70 = scmp.eq.s32.totalorder %s36, 3
      %p71 = por %p69, %p70
      %p73 = scmp.ne.s32.totalorder %s56, %s72
      %p74 = scmp.eq.s32.totalorder %s36, 0
      %p75 = por %p73, %p74
      %s76 = ssub.s32 %s37, %s49
      %p77 = scmp.eq.s32.totalorder %s76, 0
      %s79 = sadd.s32 %s78, 1
      %s80 = scalar_select %p77, %s78, %s79
      %p83 = pneg %p77
      %p84 = scmp.eq.s32.totalorder %s30, 3
      %p85 = por %p83, %p84
      %p86 = scmp.ne.s32.totalorder %s78, %s81
      %p87 = scmp.eq.s32.totalorder %s30, 0
      %p88 = por %p86, %p87
      %p89 = scmp.ne.s32.totalorder %s78, %s81
      %p90 = scmp.eq.s32.totalorder %s35, 3
      %p91 = por %p89, %p90
      %p92 = scmp.ne.s32.totalorder %s81, %s82
      %p93 = scmp.eq.s32.totalorder %s35, 0
      %p94 = por %p92, %p93
      %p95 = scmp.ne.s32.totalorder %s81, %s82
      %p96 = scmp.eq.s32.totalorder %s36, 3
      %p97 = por %p95, %p96
      %p99 = scmp.ne.s32.totalorder %s82, %s98
      %p100 = scmp.eq.s32.totalorder %s36, 0
      %p101 = por %p99, %p100
      %s102 = ssub.s32 %s37, %s49
      %p103 = scmp.eq.s32.totalorder %s102, 0
      %s105 = sadd.s32 %s104, 1
      %s106 = scalar_select %p103, %s104, %s105
      %p109 = pneg %p103
      %p110 = scmp.eq.s32.totalorder %s30, 3
      %p111 = por %p109, %p110
      %p112 = scmp.ne.s32.totalorder %s104, %s107
      %p113 = scmp.eq.s32.totalorder %s30, 0
      %p114 = por %p112, %p113
      %p115 = scmp.ne.s32.totalorder %s104, %s107
      %p116 = scmp.eq.s32.totalorder %s35, 3
      %p117 = por %p115, %p116
      %p118 = scmp.ne.s32.totalorder %s107, %s108
      %p119 = scmp.eq.s32.totalorder %s35, 0
      %p120 = por %p118, %p119
      %p121 = scmp.ne.s32.totalorder %s107, %s108
      %p122 = scmp.eq.s32.totalorder %s36, 3
      %p123 = por %p121, %p122
      %p125 = scmp.ne.s32.totalorder %s108, %s124
      %p126 = scmp.eq.s32.totalorder %s36, 0
      %p127 = por %p125, %p126
      %s129 = sadd.s32 %s128, 1
      %p132 = scmp.eq.s32.totalorder %s30, 3
      %p133 = scmp.ne.s32.totalorder %s128, %s130
      %p134 = scmp.eq.s32.totalorder %s30, 0
      %p135 = por %p133, %p134
      %p136 = scmp.ne.s32.totalorder %s128, %s130
      %p137 = scmp.eq.s32.totalorder %s35, 3
      %p138 = por %p136, %p137
      %p139 = scmp.ne.s32.totalorder %s130, %s131
      %p140 = scmp.eq.s32.totalorder %s35, 0
      %p141 = por %p139, %p140
      %p142 = scmp.ne.s32.totalorder %s130, %s131
      %p143 = scmp.eq.s32.totalorder %s36, 3
      %p144 = por %p142, %p143
      %p146 = scmp.ne.s32.totalorder %s131, %s145
      %p147 = scmp.eq.s32.totalorder %s36, 0
      %p148 = por %p146, %p147
      %s150 = sadd.s32 %s149, 1
      %p153 = scmp.eq.s32.totalorder %s30, 3
      %p154 = scmp.ne.s32.totalorder %s149, %s151
      %p155 = scmp.eq.s32.totalorder %s30, 0
      %p156 = por %p154, %p155
      %p157 = scmp.ne.s32.totalorder %s149, %s151
      %p158 = scmp.eq.s32.totalorder %s35, 3
      %p159 = por %p157, %p158
      %p160 = scmp.ne.s32.totalorder %s151, %s152
      %p161 = scmp.eq.s32.totalorder %s35, 0
      %p162 = por %p160, %p161
      %p163 = scmp.ne.s32.totalorder %s151, %s152
      %p164 = scmp.eq.s32.totalorder %s36, 3
      %p165 = por %p163, %p164
      %p167 = scmp.ne.s32.totalorder %s152, %s166
      %p168 = scmp.eq.s32.totalorder %s36, 0
      %p169 = por %p167, %p168
      %s171 = sadd.s32 %s170, 1
      %p174 = scmp.eq.s32.totalorder %s30, 3
      %p175 = scmp.ne.s32.totalorder %s170, %s172
      %p176 = scmp.eq.s32.totalorder %s30, 0
      %p177 = por %p175, %p176
      %p178 = scmp.ne.s32.totalorder %s170, %s172
      %p179 = scmp.eq.s32.totalorder %s35, 3
      %p180 = por %p178, %p179
      %p181 = scmp.ne.s32.totalorder %s172, %s173
      %p182 = scmp.eq.s32.totalorder %s35, 0
      %p183 = por %p181, %p182
      %p184 = scmp.ne.s32.totalorder %s172, %s173
      %p185 = scmp.eq.s32.totalorder %s36, 3
      %p186 = por %p184, %p185
      %p188 = scmp.ne.s32.totalorder %s173, %s187
      %p189 = scmp.eq.s32.totalorder %s36, 0
      %p190 = por %p188, %p189
      %s191 = ssub.s32 %s38, %s45
      %p192 = scmp.eq.s32.totalorder %s191, 0
      %s194 = sadd.s32 %s193, 1
      %s195 = scalar_select %p192, %s193, %s194
      %p198 = pneg %p192
      %p199 = scmp.eq.s32.totalorder %s30, 3
      %p200 = por %p198, %p199
      %p201 = scmp.ne.s32.totalorder %s193, %s196
      %p202 = scmp.eq.s32.totalorder %s30, 0
      %p203 = por %p201, %p202
      %p204 = scmp.ne.s32.totalorder %s193, %s196
      %p205 = scmp.eq.s32.totalorder %s35, 3
      %p206 = por %p204, %p205
      %p207 = scmp.ne.s32.totalorder %s196, %s197
      %p208 = scmp.eq.s32.totalorder %s35, 0
      %p209 = por %p207, %p208
      %p210 = scmp.ne.s32.totalorder %s196, %s197
      %p211 = scmp.eq.s32.totalorder %s36, 3
      %p212 = por %p210, %p211
      %p214 = scmp.ne.s32.totalorder %s197, %s213
      %p215 = scmp.eq.s32.totalorder %s36, 0
      %p216 = por %p214, %p215
      %s217 = ssub.s32 %s38, %s45
      %p218 = scmp.eq.s32.totalorder %s217, 0
      %s220 = sadd.s32 %s219, 1
      %s221 = scalar_select %p218, %s219, %s220
      %p224 = pneg %p218
      %p225 = scmp.eq.s32.totalorder %s30, 3
      %p226 = por %p224, %p225
      %p227 = scmp.ne.s32.totalorder %s219, %s222
      %p228 = scmp.eq.s32.totalorder %s30, 0
      %p229 = por %p227, %p228
      %p230 = scmp.ne.s32.totalorder %s219, %s222
      %p231 = scmp.eq.s32.totalorder %s35, 3
      %p232 = por %p230, %p231
      %p233 = scmp.ne.s32.totalorder %s222, %s223
      %p234 = scmp.eq.s32.totalorder %s35, 0
      %p235 = por %p233, %p234
      %p236 = scmp.ne.s32.totalorder %s222, %s223
      %p237 = scmp.eq.s32.totalorder %s36, 3
      %p238 = por %p236, %p237
      %p240 = scmp.ne.s32.totalorder %s223, %s239
      %p241 = scmp.eq.s32.totalorder %s36, 0
      %p242 = por %p240, %p241
      %s243 = ssub.s32 %s38, %s45
      %p244 = scmp.eq.s32.totalorder %s243, 0
      %s246 = sadd.s32 %s245, 1
      %s247 = scalar_select %p244, %s245, %s246
      %p250 = pneg %p244
      %p251 = scmp.eq.s32.totalorder %s30, 3
      %p252 = por %p250, %p251
      %p253 = scmp.ne.s32.totalorder %s245, %s248
      %p254 = scmp.eq.s32.totalorder %s30, 0
      %p255 = por %p253, %p254
      %p256 = scmp.ne.s32.totalorder %s245, %s248
      %p257 = scmp.eq.s32.totalorder %s35, 3
      %p258 = por %p256, %p257
      %p259 = scmp.ne.s32.totalorder %s248, %s249
      %p260 = scmp.eq.s32.totalorder %s35, 0
      %p261 = por %p259, %p260
      %p262 = scmp.ne.s32.totalorder %s248, %s249
      %p263 = scmp.eq.s32.totalorder %s36, 3
      %p264 = por %p262, %p263
      %p266 = scmp.ne.s32.totalorder %s249, %s265
      %p267 = scmp.eq.s32.totalorder %s36, 0
      %p268 = por %p266, %p267
      %s269 = ssub.s32 %s38, %s45
      %p270 = scmp.eq.s32.totalorder %s269, 0
      %s272 = sadd.s32 %s271, 1
      %s273 = scalar_select %p270, %s271, %s272
      %p276 = pneg %p270
      %p277 = scmp.eq.s32.totalorder %s30, 3
      %p278 = por %p276, %p277
      %p279 = scmp.ne.s32.totalorder %s271, %s274
      %p280 = scmp.eq.s32.totalorder %s30, 0
      %p281 = por %p279, %p280
      %p282 = scmp.ne.s32.totalorder %s271, %s274
      %p283 = scmp.eq.s32.totalorder %s35, 3
      %p284 = por %p282, %p283
      %p285 = scmp.ne.s32.totalorder %s274, %s275
      %p286 = scmp.eq.s32.totalorder %s35, 0
      %p287 = por %p285, %p286
      %p288 = scmp.ne.s32.totalorder %s274, %s275
      %p289 = scmp.eq.s32.totalorder %s36, 3
      %p290 = por %p288, %p289
      %p292 = scmp.ne.s32.totalorder %s275, %s291
      %p293 = scmp.eq.s32.totalorder %s36, 0
      %p294 = por %p292, %p293
      %s295 = ssub.s32 %s38, %s45
      %p296 = scmp.eq.s32.totalorder %s295, 0
      %s298 = sadd.s32 %s297, 1
      %s299 = scalar_select %p296, %s297, %s298
      %p302 = pneg %p296
      %p303 = scmp.eq.s32.totalorder %s30, 3
      %p304 = por %p302, %p303
      %p305 = scmp.ne.s32.totalorder %s297, %s300
      %p306 = scmp.eq.s32.totalorder %s30, 0
      %p307 = por %p305, %p306
      %p308 = scmp.ne.s32.totalorder %s297, %s300
      %p309 = scmp.eq.s32.totalorder %s35, 3
      %p310 = por %p308, %p309
      %p311 = scmp.ne.s32.totalorder %s300, %s301
      %p312 = scmp.eq.s32.totalorder %s35, 0
      %p313 = por %p311, %p312
      %p314 = scmp.ne.s32.totalorder %s300, %s301
      %p315 = scmp.eq.s32.totalorder %s36, 3
      %p316 = por %p314, %p315
      %p318 = scmp.ne.s32.totalorder %s301, %s317
      %p319 = scmp.eq.s32.totalorder %s36, 0
      %p320 = por %p318, %p319
      %s321 = ssub.s32 %s37, %s49
      %p322 = scmp.eq.s32.totalorder %s321, 0
      %s324 = sadd.s32 %s323, 1
      %s325 = scalar_select %p322, %s323, %s324
      %p328 = pneg %p322
      %p329 = scmp.eq.s32.totalorder %s30, 3
      %p330 = por %p328, %p329
      %p331 = scmp.ne.s32.totalorder %s323, %s326
      %p332 = scmp.eq.s32.totalorder %s30, 0
      %p333 = por %p331, %p332
      %p334 = scmp.ne.s32.totalorder %s323, %s326
      %p335 = scmp.eq.s32.totalorder %s35, 3
      %p336 = por %p334, %p335
      %p337 = scmp.ne.s32.totalorder %s326, %s327
      %p338 = scmp.eq.s32.totalorder %s35, 0
      %p339 = por %p337, %p338
      %p340 = scmp.ne.s32.totalorder %s326, %s327
      %p341 = scmp.eq.s32.totalorder %s36, 3
      %p342 = por %p340, %p341
      %p344 = scmp.ne.s32.totalorder %s327, %s343
      %p345 = scmp.eq.s32.totalorder %s36, 0
      %p346 = por %p344, %p345
      %s347 = ssub.s32 %s37, %s49
      %s348 = ssub.s32 %s38, %s45
      %s349 = sor.u32 %s347, %s348
      %p350 = scmp.eq.s32.totalorder %s349, 0
      %s352 = sadd.s32 %s351, 1
      %s353 = scalar_select %p350, %s351, %s352
      %p356 = pneg %p350
      %p357 = scmp.eq.s32.totalorder %s30, 3
      %p358 = por %p356, %p357
      %p359 = scmp.ne.s32.totalorder %s351, %s354
      %p360 = scmp.eq.s32.totalorder %s30, 0
      %p361 = por %p359, %p360
      %p362 = scmp.ne.s32.totalorder %s351, %s354
      %p363 = scmp.eq.s32.totalorder %s35, 3
      %p364 = por %p362, %p363
      %p365 = scmp.ne.s32.totalorder %s354, %s355
      %p366 = scmp.eq.s32.totalorder %s35, 0
      %p367 = por %p365, %p366
      %p368 = scmp.ne.s32.totalorder %s354, %s355
      %p369 = scmp.eq.s32.totalorder %s36, 3
      %p370 = por %p368, %p369
      %p372 = scmp.ne.s32.totalorder %s355, %s371
      %p373 = scmp.eq.s32.totalorder %s36, 0
      %p374 = por %p372, %p373
      %p375 = scmp.le.s32.totalorder 1, %s30
      %p376 = scmp.lt.s32.totalorder %s30, 5
      %p377 = pnand %p375, %p376
      %p378 = pneg %p377
      // Predicated region
      $region9: #{tpu_custom_call.1} parent=5 // pred_check
        _
      $region10: #{tpu_custom_call.1} parent=5 // pred_check_branch
        %380 = sbr.rel (%p377) target = $region12
      $region11: #{tpu_custom_call.1} parent=5 // pred_region
        %s381 = ssub.s32 %s30, 1
        // Predicated region
        $region13: #{tpu_custom_call.1} parent=11 // pred_check
          %p382 = pneg %p141
        $region14: #{tpu_custom_call.1} parent=11 // pred_check_branch
          %384 = sbr.rel (%p382) target = $region16
        $region15: #{tpu_custom_call.1} parent=11 // pred_region
          %s386 = ssub.s32 64, 64
          %387 = vsyncadd [#allocation5], %s386
          %s389 = sshll.u32 [#allocation4], 4
          %s390 = int_to_ptr.vmem [resolvable:$true] %s389
          %392 = dma.hbm_to_vmem [thread:$0]  %s3, 64, %s390, [#allocation5]
        $region16: #{tpu_custom_call.1} parent=11 // pred_fallthru
          _
        // Predicated region
        $region17: #{tpu_custom_call.1} parent=11 // pred_check
          %p393 = pneg %p162
        $region18: #{tpu_custom_call.1} parent=11 // pred_check_branch
          %395 = sbr.rel (%p393) target = $region20
        $region19: #{tpu_custom_call.1} parent=11 // pred_region
          %s397 = ssub.s32 16, 16
          %398 = vsyncadd [#allocation8], %s397
          %s400 = sshll.u32 [#allocation7], 4
          %s401 = int_to_ptr.vmem [resolvable:$true] %s400
          %403 = dma.hbm_to_vmem [thread:$0]  %s4, 16, %s401, [#allocation8]
        $region20: #{tpu_custom_call.1} parent=11 // pred_fallthru
          _
        // Predicated region
        $region21: #{tpu_custom_call.1} parent=11 // pred_check
          %p404 = pneg %p183
        $region22: #{tpu_custom_call.1} parent=11 // pred_check_branch
          %406 = sbr.rel (%p404) target = $region24
        $region23: #{tpu_custom_call.1} parent=11 // pred_region
          %s408 = ssub.s32 16, 16
          %409 = vsyncadd [#allocation8], %s408
          %s411 = sshll.u32 [#allocation9], 4
          %s412 = int_to_ptr.vmem [resolvable:$true] %s411
          %414 = dma.hbm_to_vmem [thread:$0]  %s5, 16, %s412, [#allocation8]
        $region24: #{tpu_custom_call.1} parent=11 // pred_fallthru
          _
      $region12: #{tpu_custom_call.1} parent=5 // pred_fallthru
        _
      %p415 = scmp.lt.s32.totalorder %s30, 4
      // Predicated region
      $region25: #{tpu_custom_call.1} parent=5 // pred_check
        %p416 = pneg %p415
      $region26: #{tpu_custom_call.1} parent=5 // pred_check_branch
        %418 = sbr.rel (%p416) target = $region28
      $region27: #{tpu_custom_call.1} parent=5 // pred_region
        // Predicated region
        $region29: #{tpu_custom_call.1} parent=27 // pred_check
          %p419 = pneg %p62
        $region30: #{tpu_custom_call.1} parent=27 // pred_check_branch
          %421 = sbr.rel (%p419) target = $region32
        $region31: #{tpu_custom_call.1} parent=27 // pred_region
          %s422 = smul.u32 2, %s37
          %p423 = scmp.lt.s32.totalorder %s422, 3
          %s424 = scalar_select %p423, %s422, 3
          %s425 = smul.addr %s424, 4
          %s426 = scalar_lea.vmem %s0, %s425
          %s427 = smul.u32 2, %s37
        $region32: #{tpu_custom_call.1} parent=27 // pred_fallthru
          _
        // Predicated region
        $region33: #{tpu_custom_call.1} parent=27 // pred_check
          %p428 = pneg %p88
        $region34: #{tpu_custom_call.1} parent=27 // pred_check_branch
          %430 = sbr.rel (%p428) target = $region36
        $region35: #{tpu_custom_call.1} parent=27 // pred_region
          %s431 = smul.u32 2, %s37
          %p432 = scmp.lt.s32.totalorder %s431, 3
          %s433 = scalar_select %p432, %s431, 3
          %s434 = smul.addr %s433, 8
          %s435 = scalar_lea.vmem %s1, %s434
          %s436 = smul.u32 2, %s37
        $region36: #{tpu_custom_call.1} parent=27 // pred_fallthru
          _
        // Predicated region
        $region37: #{tpu_custom_call.1} parent=27 // pred_check
          %p437 = pneg %p114
        $region38: #{tpu_custom_call.1} parent=27 // pred_check_branch
          %439 = sbr.rel (%p437) target = $region40
        $region39: #{tpu_custom_call.1} parent=27 // pred_region
          %s440 = smul.u32 2, %s37
          %p441 = scmp.lt.s32.totalorder %s440, 3
          %s442 = scalar_select %p441, %s440, 3
          %s443 = smul.addr %s442, 8
          %s444 = scalar_lea.vmem %s2, %s443
          %s445 = smul.u32 2, %s37
        $region40: #{tpu_custom_call.1} parent=27 // pred_fallthru
          _
        // Predicated region
        $region41: #{tpu_custom_call.1} parent=27 // pred_check
          %p446 = pneg %p203
        $region42: #{tpu_custom_call.1} parent=27 // pred_check_branch
          %448 = sbr.rel (%p446) target = $region44
        $region43: #{tpu_custom_call.1} parent=27 // pred_region
          %s449 = sand.u32 %s193, 1
          %s450 = sand.u32 %s193, 1
          %s451 = smul.addr %s450, 32
          %s452 = scalar_lea.vmem [#allocation10], %s451
          %s453 = smul.addr %s38, 4
          %s454 = scalar_lea.vmem %s6, %s453
          // Predicated region
          $region45: #{tpu_custom_call.1} parent=43 // pred_check
            _
          $region46: #{tpu_custom_call.1} parent=43 // pred_check_branch
            %456 = sbr.rel (0) target = $region48
          $region47: #{tpu_custom_call.1} parent=43 // pred_region
            // Predicated region
            $region49: #{tpu_custom_call.1} parent=47 // pred_check
              _
            $region50: #{tpu_custom_call.1} parent=47 // pred_check_branch
              %458 = sbr.rel target = $region52
            $region51: #{tpu_custom_call.1} parent=47 // pred_region
              // Predicated region
              $region64: #{tpu_custom_call.1} parent=51 // pred_check
                _
              $region65: #{tpu_custom_call.1} parent=51 // pred_check_branch
                %487 = sbr.rel (0) target = $region67
              $region66: #{tpu_custom_call.1} parent=51 // pred_region
                loop: start=0, step=1, limit=1
                $region68: #{tpu_custom_call.1} parent=66 // loop_pre_header
                  _
                $region69: #{tpu_custom_call.1} parent=66 // loop_header
                  %s489 = sphi 0, %s493
                  %p490 = scmp.ge.s32.totalorder %s489, 1
                  %s494 = sphi %s454, %s454
                  %s495 = sphi %s452, %s452
                $region70: #{tpu_custom_call.1} parent=66 // loop_header_branch
                  %492 = sbr.rel (%p490) target = $region74
                $region71: #{tpu_custom_call.1} parent=66 // loop_body
                  _
                $region72: #{tpu_custom_call.1} parent=66 // loop_footer
                  %s493 = sadd.s32 1, %s489
                $region73: #{tpu_custom_call.1} parent=66 // loop_footer_branch
                  %488 = sbr.rel target = $region69
                $region74: #{tpu_custom_call.1} parent=66 // loop_exit
                  _
                loop: start=0, step=1, limit=1
                $region75: #{tpu_custom_call.1} parent=66 // loop_pre_header
                  _
                $region76: #{tpu_custom_call.1} parent=66 // loop_header
                  %s498 = sphi 0, %s502
                  %p499 = scmp.ge.s32.totalorder %s498, 1
                  %s503 = sphi %s454, %s454
                  %s504 = sphi %s452, %s452
                $region77: #{tpu_custom_call.1} parent=66 // loop_header_branch
                  %501 = sbr.rel (%p499) target = $region81
                $region78: #{tpu_custom_call.1} parent=66 // loop_body
                  %v505 = vld [vmem:[%s503] sm:$0xf]
                  %506 = vst [vmem:[%s504] sm:$0xf] %v505
                  %v507 = vld [vmem:[%s503 + $0x8] sm:$0xf]
                  %508 = vst [vmem:[%s504 + $0x4] sm:$0xf] %v507
                  %v509 = vld [vmem:[%s503 + $0x10] sm:$0xf]
                  %510 = vst [vmem:[%s504 + $0x8] sm:$0xf] %v509
                  %v511 = vld [vmem:[%s503 + $0x18] sm:$0xf]
                  %512 = vst [vmem:[%s504 + $0xc] sm:$0xf] %v511
                  %v513 = vld [vmem:[%s503 + $0x20] sm:$0xf]
                  %514 = vst [vmem:[%s504 + $0x10] sm:$0xf] %v513
                  %v515 = vld [vmem:[%s503 + $0x28] sm:$0xf]
                  %516 = vst [vmem:[%s504 + $0x14] sm:$0xf] %v515
                  %v517 = vld [vmem:[%s503 + $0x30] sm:$0xf]
                  %518 = vst [vmem:[%s504 + $0x18] sm:$0xf] %v517
                  %v519 = vld [vmem:[%s503 + $0x38] sm:$0xf]
                  %520 = vst [vmem:[%s504 + $0x1c] sm:$0xf] %v519
                $region79: #{tpu_custom_call.1} parent=66 // loop_footer
                  %s502 = sadd.s32 1, %s498
                $region80: #{tpu_custom_call.1} parent=66 // loop_footer_branch
                  %497 = sbr.rel target = $region76
                $region81: #{tpu_custom_call.1} parent=66 // loop_exit
                  _
              $region67: #{tpu_custom_call.1} parent=51 // pred_fallthru
                _
            $region52: #{tpu_custom_call.1} parent=47 // pred_fallthru
              _
            // Predicated region
            $region53: #{tpu_custom_call.1} parent=47 // pred_check
              _
            $region54: #{tpu_custom_call.1} parent=47 // pred_check_branch
              %460 = sbr.rel (0) target = $region56
            $region55: #{tpu_custom_call.1} parent=47 // pred_region
              loop: start=0, step=1, limit=1
              $region57: #{tpu_custom_call.1} parent=55 // loop_pre_header
                _
              $region58: #{tpu_custom_call.1} parent=55 // loop_header
                %s463 = sphi 0, %s467
                %p464 = scmp.ge.s32.totalorder %s463, 1
                %s468 = sphi %s454, %s454
                %s469 = sphi %s452, %s452
              $region59: #{tpu_custom_call.1} parent=55 // loop_header_branch
                %466 = sbr.rel (%p464) target = $region63
              $region60: #{tpu_custom_call.1} parent=55 // loop_body
                %v470 = vld [vmem:[%s468] sm:$0xf]
                %471 = vst [vmem:[%s469] sm:$0xf] %v470
                %v472 = vld [vmem:[%s468 + $0x8] sm:$0xf]
                %473 = vst [vmem:[%s469 + $0x4] sm:$0xf] %v472
                %v474 = vld [vmem:[%s468 + $0x10] sm:$0xf]
                %475 = vst [vmem:[%s469 + $0x8] sm:$0xf] %v474
                %v476 = vld [vmem:[%s468 + $0x18] sm:$0xf]
                %477 = vst [vmem:[%s469 + $0xc] sm:$0xf] %v476
                %v478 = vld [vmem:[%s468 + $0x20] sm:$0xf]
                %479 = vst [vmem:[%s469 + $0x10] sm:$0xf] %v478
                %v480 = vld [vmem:[%s468 + $0x28] sm:$0xf]
                %481 = vst [vmem:[%s469 + $0x14] sm:$0xf] %v480
                %v482 = vld [vmem:[%s468 + $0x30] sm:$0xf]
                %483 = vst [vmem:[%s469 + $0x18] sm:$0xf] %v482
                %v484 = vld [vmem:[%s468 + $0x38] sm:$0xf]
                %485 = vst [vmem:[%s469 + $0x1c] sm:$0xf] %v484
              $region61: #{tpu_custom_call.1} parent=55 // loop_footer
                %s467 = sadd.s32 1, %s463
              $region62: #{tpu_custom_call.1} parent=55 // loop_footer_branch
                %462 = sbr.rel target = $region58
              $region63: #{tpu_custom_call.1} parent=55 // loop_exit
                _
            $region56: #{tpu_custom_call.1} parent=47 // pred_fallthru
              _
          $region48: #{tpu_custom_call.1} parent=43 // pred_fallthru
            _
          %521 = vnop
        $region44: #{tpu_custom_call.1} parent=27 // pred_fallthru
          _
        // Predicated region
        $region82: #{tpu_custom_call.1} parent=27 // pred_check
          %p522 = pneg %p229
        $region83: #{tpu_custom_call.1} parent=27 // pred_check_branch
          %524 = sbr.rel (%p522) target = $region85
        $region84: #{tpu_custom_call.1} parent=27 // pred_region
          %s525 = sand.u32 %s30, 1
          %s526 = scalar_lea.sflag [#allocation12], %s525
          %s527 = sand.u32 %s219, 1
          %s528 = smul.addr %s527, 4
          %s529 = scalar_lea.vmem [#allocation11], %s528
          %s531 = ssub.s32 64, 64
          %532 = vsyncadd %s526, %s531
          %s533 = smul.addr %s38, 64
          %s534 = scalar_lea.hbm %s7, %s533
          %s536 = sshll.u32 %s529, 4
          %s537 = int_to_ptr.vmem [resolvable:$true] %s536
          %539 = dma.hbm_to_vmem [thread:$0]  %s534, 64, %s537, %s526
        $region85: #{tpu_custom_call.1} parent=27 // pred_fallthru
          _
        // Predicated region
        $region86: #{tpu_custom_call.1} parent=27 // pred_check
          %p540 = pneg %p255
        $region87: #{tpu_custom_call.1} parent=27 // pred_check_branch
          %542 = sbr.rel (%p540) target = $region89
        $region88: #{tpu_custom_call.1} parent=27 // pred_region
          %s543 = sand.u32 %s245, 1
          %s544 = sand.u32 %s245, 1
          %s545 = smul.addr %s544, 8
          %s546 = scalar_lea.vmem [#allocation13], %s545
          %s547 = smul.addr %s38, 4
          %s548 = scalar_lea.vmem %s8, %s547
          // Predicated region
          $region90: #{tpu_custom_call.1} parent=88 // pred_check
            _
          $region91: #{tpu_custom_call.1} parent=88 // pred_check_branch
            %550 = sbr.rel (0) target = $region93
          $region92: #{tpu_custom_call.1} parent=88 // pred_region
            // Predicated region
            $region94: #{tpu_custom_call.1} parent=92 // pred_check
              _
            $region95: #{tpu_custom_call.1} parent=92 // pred_check_branch
              %552 = sbr.rel target = $region97
            $region96: #{tpu_custom_call.1} parent=92 // pred_region
              // Predicated region
              $region109: #{tpu_custom_call.1} parent=96 // pred_check
                _
              $region110: #{tpu_custom_call.1} parent=96 // pred_check_branch
                %569 = sbr.rel (0) target = $region112
              $region111: #{tpu_custom_call.1} parent=96 // pred_region
                loop: start=0, step=1, limit=1
                $region113: #{tpu_custom_call.1} parent=111 // loop_pre_header
                  _
                $region114: #{tpu_custom_call.1} parent=111 // loop_header
                  %s571 = sphi 0, %s575
                  %p572 = scmp.ge.s32.totalorder %s571, 1
                  %s576 = sphi %s548, %s548
                  %s577 = sphi %s546, %s546
                $region115: #{tpu_custom_call.1} parent=111 // loop_header_branch
                  %574 = sbr.rel (%p572) target = $region119
                $region116: #{tpu_custom_call.1} parent=111 // loop_body
                  _
                $region117: #{tpu_custom_call.1} parent=111 // loop_footer
                  %s575 = sadd.s32 1, %s571
                $region118: #{tpu_custom_call.1} parent=111 // loop_footer_branch
                  %570 = sbr.rel target = $region114
                $region119: #{tpu_custom_call.1} parent=111 // loop_exit
                  _
                loop: start=0, step=1, limit=1
                $region120: #{tpu_custom_call.1} parent=111 // loop_pre_header
                  _
                $region121: #{tpu_custom_call.1} parent=111 // loop_header
                  %s580 = sphi 0, %s584
                  %p581 = scmp.ge.s32.totalorder %s580, 1
                  %s585 = sphi %s548, %s548
                  %s586 = sphi %s546, %s546
                $region122: #{tpu_custom_call.1} parent=111 // loop_header_branch
                  %583 = sbr.rel (%p581) target = $region126
                $region123: #{tpu_custom_call.1} parent=111 // loop_body
                  %v587 = vld [vmem:[%s585] sm:$0xf]
                  %588 = vst [vmem:[%s586] sm:$0xf] %v587
                  %v589 = vld [vmem:[%s585 + $0x8] sm:$0xf]
                  %590 = vst [vmem:[%s586 + $0x4] sm:$0xf] %v589
                $region124: #{tpu_custom_call.1} parent=111 // loop_footer
                  %s584 = sadd.s32 1, %s580
                $region125: #{tpu_custom_call.1} parent=111 // loop_footer_branch
                  %579 = sbr.rel target = $region121
                $region126: #{tpu_custom_call.1} parent=111 // loop_exit
                  _
              $region112: #{tpu_custom_call.1} parent=96 // pred_fallthru
                _
            $region97: #{tpu_custom_call.1} parent=92 // pred_fallthru
              _
            // Predicated region
            $region98: #{tpu_custom_call.1} parent=92 // pred_check
              _
            $region99: #{tpu_custom_call.1} parent=92 // pred_check_branch
              %554 = sbr.rel (0) target = $region101
            $region100: #{tpu_custom_call.1} parent=92 // pred_region
              loop: start=0, step=1, limit=1
              $region102: #{tpu_custom_call.1} parent=100 // loop_pre_header
                _
              $region103: #{tpu_custom_call.1} parent=100 // loop_header
                %s557 = sphi 0, %s561
                %p558 = scmp.ge.s32.totalorder %s557, 1
                %s562 = sphi %s548, %s548
                %s563 = sphi %s546, %s546
              $region104: #{tpu_custom_call.1} parent=100 // loop_header_branch
                %560 = sbr.rel (%p558) target = $region108
              $region105: #{tpu_custom_call.1} parent=100 // loop_body
                %v564 = vld [vmem:[%s562] sm:$0xf]
                %565 = vst [vmem:[%s563] sm:$0xf] %v564
                %v566 = vld [vmem:[%s562 + $0x8] sm:$0xf]
                %567 = vst [vmem:[%s563 + $0x4] sm:$0xf] %v566
              $region106: #{tpu_custom_call.1} parent=100 // loop_footer
                %s561 = sadd.s32 1, %s557
              $region107: #{tpu_custom_call.1} parent=100 // loop_footer_branch
                %556 = sbr.rel target = $region103
              $region108: #{tpu_custom_call.1} parent=100 // loop_exit
                _
            $region101: #{tpu_custom_call.1} parent=92 // pred_fallthru
              _
          $region93: #{tpu_custom_call.1} parent=88 // pred_fallthru
            _
          %591 = vnop
        $region89: #{tpu_custom_call.1} parent=27 // pred_fallthru
          _
        // Predicated region
        $region127: #{tpu_custom_call.1} parent=27 // pred_check
          %p592 = pneg %p281
        $region128: #{tpu_custom_call.1} parent=27 // pred_check_branch
          %594 = sbr.rel (%p592) target = $region130
        $region129: #{tpu_custom_call.1} parent=27 // pred_region
          %p595 = scmp.lt.s32.totalorder %s38, 1
          %s596 = scalar_select %p595, %s38, 1
          %s597 = scalar_lea.vmem %s9, %s596
        $region130: #{tpu_custom_call.1} parent=27 // pred_fallthru
          _
        // Predicated region
        $region131: #{tpu_custom_call.1} parent=27 // pred_check
          %p598 = pneg %p307
        $region132: #{tpu_custom_call.1} parent=27 // pred_check_branch
          %600 = sbr.rel (%p598) target = $region134
        $region133: #{tpu_custom_call.1} parent=27 // pred_region
          %s601 = sand.u32 %s30, 1
          %s602 = scalar_lea.sflag [#allocation12], %s601
          %s603 = sand.u32 %s297, 1
          %s604 = smul.addr %s603, 64
          %s605 = scalar_lea.vmem [#allocation14], %s604
          %s606 = smul.u32 16, %s38
          %s608 = ssub.s32 1024, 1024
          %609 = vsyncadd %s602, %s608
          %s610 = smul.addr %s606, 64
          %s611 = scalar_lea.hbm %s10, %s610
          %s612 = sshll.u32 %s605, 4
          %s613 = int_to_ptr.vmem [resolvable:$true] %s612
          %618 = dma.hbm_to_vmem [thread:$0]  %s611, 1024, %s613, %s602, 64, 64, 4
        $region134: #{tpu_custom_call.1} parent=27 // pred_fallthru
          _
      $region28: #{tpu_custom_call.1} parent=5 // pred_fallthru
        _
      %p619 = scmp.le.s32.totalorder 1, %s30
      %p620 = scmp.lt.s32.totalorder %s30, 5
      %p621 = pnand %p619, %p620
      %p622 = pneg %p621
      // Predicated region
      $region135: #{tpu_custom_call.1} parent=5 // pred_check
        _
      $region136: #{tpu_custom_call.1} parent=5 // pred_check_branch
        %624 = sbr.rel (%p621) target = $region138
      $region137: #{tpu_custom_call.1} parent=5 // pred_region
        %s625 = ssub.s32 %s30, 1
        // Predicated region
        $region139: #{tpu_custom_call.1} parent=137 // pred_check
          %p626 = pneg %p141
        $region140: #{tpu_custom_call.1} parent=137 // pred_check_branch
          %628 = sbr.rel (%p626) target = $region142
        $region141: #{tpu_custom_call.1} parent=137 // pred_region
          %629 = dma.done [#allocation5], 64
        $region142: #{tpu_custom_call.1} parent=137 // pred_fallthru
          _
        // Predicated region
        $region143: #{tpu_custom_call.1} parent=137 // pred_check
          %p630 = pneg %p162
        $region144: #{tpu_custom_call.1} parent=137 // pred_check_branch
          %632 = sbr.rel (%p630) target = $region146
        $region145: #{tpu_custom_call.1} parent=137 // pred_region
          %633 = dma.done [#allocation8], 16
        $region146: #{tpu_custom_call.1} parent=137 // pred_fallthru
          _
        // Predicated region
        $region147: #{tpu_custom_call.1} parent=137 // pred_check
          %p634 = pneg %p183
        $region148: #{tpu_custom_call.1} parent=137 // pred_check_branch
          %636 = sbr.rel (%p634) target = $region150
        $region149: #{tpu_custom_call.1} parent=137 // pred_region
          %637 = dma.done [#allocation8], 16
        $region150: #{tpu_custom_call.1} parent=137 // pred_fallthru
          _
        %s638 = sand.u32 %s196, 1
        %s639 = sand.u32 %s196, 1
        %s640 = smul.addr %s639, 32
        %s641 = scalar_lea.vmem [#allocation10], %s640
        // Predicated region
        $region151: #{tpu_custom_call.1} parent=137 // pred_check
          %p642 = pneg %p209
        $region152: #{tpu_custom_call.1} parent=137 // pred_check_branch
          %644 = sbr.rel (%p642) target = $region154
        $region153: #{tpu_custom_call.1} parent=137 // pred_region
          _
        $region154: #{tpu_custom_call.1} parent=137 // pred_fallthru
          _
        %s645 = sand.u32 %s35, 1
        %s646 = scalar_lea.sflag [#allocation12], %s645
        %s647 = sand.u32 %s222, 1
        %s648 = smul.addr %s647, 4
        %s649 = scalar_lea.vmem [#allocation11], %s648
        // Predicated region
        $region155: #{tpu_custom_call.1} parent=137 // pred_check
          %p650 = pneg %p235
        $region156: #{tpu_custom_call.1} parent=137 // pred_check_branch
          %652 = sbr.rel (%p650) target = $region158
        $region157: #{tpu_custom_call.1} parent=137 // pred_region
          %653 = dma.done %s646, 64
        $region158: #{tpu_custom_call.1} parent=137 // pred_fallthru
          _
        %s654 = sand.u32 %s248, 1
        %s655 = sand.u32 %s248, 1
        %s656 = smul.addr %s655, 8
        %s657 = scalar_lea.vmem [#allocation13], %s656
        // Predicated region
        $region159: #{tpu_custom_call.1} parent=137 // pred_check
          %p658 = pneg %p261
        $region160: #{tpu_custom_call.1} parent=137 // pred_check_branch
          %660 = sbr.rel (%p658) target = $region162
        $region161: #{tpu_custom_call.1} parent=137 // pred_region
          _
        $region162: #{tpu_custom_call.1} parent=137 // pred_fallthru
          _
        %s661 = sand.u32 %s35, 1
        %s662 = scalar_lea.sflag [#allocation12], %s661
        %s663 = sand.u32 %s300, 1
        %s664 = smul.addr %s663, 64
        %s665 = scalar_lea.vmem [#allocation14], %s664
        // Predicated region
        $region163: #{tpu_custom_call.1} parent=137 // pred_check
          %p666 = pneg %p313
        $region164: #{tpu_custom_call.1} parent=137 // pred_check_branch
          %668 = sbr.rel (%p666) target = $region166
        $region165: #{tpu_custom_call.1} parent=137 // pred_region
          %669 = dma.done %s662, 1024
        $region166: #{tpu_custom_call.1} parent=137 // pred_fallthru
          _
        %s670 = smul.u32 2, %s39
        %p671 = scmp.lt.s32.totalorder %s670, 3
        %s672 = scalar_select %p671, %s670, 3
        %s673 = smul.addr %s672, 4
        %s674 = scalar_lea.vmem %s0, %s673
        %p675 = pneg %p68
        %p676 = pneg %p65
        %s677 = smul.u32 2, %s39
        %p678 = scmp.lt.s32.totalorder %s677, 3
        %s679 = scalar_select %p678, %s677, 3
        %s680 = smul.addr %s679, 8
        %s681 = scalar_lea.vmem %s1, %s680
        %p682 = pneg %p94
        %p683 = pneg %p91
        %s684 = smul.u32 2, %s39
        %p685 = scmp.lt.s32.totalorder %s684, 3
        %s686 = scalar_select %p685, %s684, 3
        %s687 = smul.addr %s686, 8
        %s688 = scalar_lea.vmem %s2, %s687
        %p689 = pneg %p120
        %p690 = pneg %p117
        %p691 = pneg %p141
        %p692 = pneg %p138
        %p693 = pneg %p162
        %p694 = pneg %p159
        %p695 = pneg %p183
        %p696 = pneg %p180
        %s697 = sand.u32 %s196, 1
        %s698 = sand.u32 %s196, 1
        %s699 = smul.addr %s698, 32
        %s700 = scalar_lea.vmem [#allocation10], %s699
        %p701 = pneg %p209
        %p702 = pneg %p206
        %s703 = sand.u32 %s35, 1
        %s704 = scalar_lea.sflag [#allocation12], %s703
        %s705 = sand.u32 %s222, 1
        %s706 = smul.addr %s705, 4
        %s707 = scalar_lea.vmem [#allocation11], %s706
        %p708 = pneg %p235
        %p709 = pneg %p232
        %s710 = sand.u32 %s248, 1
        %s711 = sand.u32 %s248, 1
        %s712 = smul.addr %s711, 8
        %s713 = scalar_lea.vmem [#allocation13], %s712
        %p714 = pneg %p261
        %p715 = pneg %p258
        %p716 = scmp.lt.s32.totalorder %s40, 1
        %s717 = scalar_select %p716, %s40, 1
        %s718 = scalar_lea.vmem %s9, %s717
        %p719 = pneg %p287
        %p720 = pneg %p284
        %s721 = sand.u32 %s35, 1
        %s722 = scalar_lea.sflag [#allocation12], %s721
        %s723 = sand.u32 %s300, 1
        %s724 = smul.addr %s723, 64
        %s725 = scalar_lea.vmem [#allocation14], %s724
        %p726 = pneg %p313
        %p727 = pneg %p310
        %p728 = pneg %p339
        %p729 = pneg %p336
        %s730 = sand.u32 %s326, 1
        %s731 = scalar_lea.sflag [#allocation6], %s730
        %s732 = sand.u32 %s326, 1
        %s733 = smul.addr %s732, 16
        %s734 = scalar_lea.vmem [#allocation15], %s733
        %p735 = pneg %p367
        %p736 = pneg %p364
        %s737 = sand.u32 %s354, 1
        %s738 = scalar_lea.sflag [#allocation17], %s737
        %s739 = sand.u32 %s354, 1
        %s740 = smul.addr %s739, 8
        %s741 = scalar_lea.vmem [#allocation16], %s740
        %s742 = smul.u32 2, %s39
        %p743 = scmp.lt.s32.totalorder %s742, 3
        %s744 = scalar_select %p743, %s742, 3
        %s745 = smul.addr %s744, 4
        %s746 = scalar_lea.vmem %s0, %s745
        %s747 = smul.u32 2, %s39
        %s748 = smul.u32 2, %s39
        %p749 = scmp.lt.s32.totalorder %s748, 3
        %s750 = scalar_select %p749, %s748, 3
        %s751 = smul.addr %s750, 8
        %s752 = scalar_lea.vmem %s1, %s751
        %s753 = smul.u32 2, %s39
        %s754 = smul.u32 2, %s39
        %p755 = scmp.lt.s32.totalorder %s754, 3
        %s756 = scalar_select %p755, %s754, 3
        %s757 = smul.addr %s756, 8
        %s758 = scalar_lea.vmem %s2, %s757
        %s759 = smul.u32 2, %s39
        %p760 = scmp.lt.s32.totalorder %s40, 1
        %s761 = scalar_select %p760, %s40, 1
        %s762 = scalar_lea.vmem %s9, %s761
        %s763 = smul.u32 16, %s40
        %s764 = smul.u32 2, %s39
        %s765 = smul.u32 2, %s39
        %p767 = scmp.eq.s32.totalorder %s40, 0
        // Predicated region
        $region167: #{tpu_custom_call.1} parent=137 // pred_check
          %p768 = pneg %p767
        $region168: #{tpu_custom_call.1} parent=137 // pred_check_branch
          %770 = sbr.rel (%p768) target = $region170
        $region169: #{tpu_custom_call.1} parent=137 // pred_region
          %v771 = vld [vmem:[%s752] sm:$0xff]
          %v772 = vld [vmem:[%s752 + $0x8] sm:$0xff]
          %vm773 = vcmask 64512
          %v774 = vsel %vm773, %v771, -inf
          %775 = vmax.xlane.f32.xlu0 %v774
          %v776 = vpop.xlane.xlu0 %775
          %v777 = vsel %vm773, %v772, -inf
          %778 = vmax.xlane.f32.xlu0 %v777
          %v779 = vpop.xlane.xlu0 %778
          %v780 = vsub.f32 %v771, %v776
          %v781 = vsub.f32 %v772, %v779
          %v782 = vmul.f32 %v780, 1.442695
          %v783 = vpow.pop %v782
          %v784 = vmul.f32 %v781, 1.442695
          %v785 = vpow.pop %v784
          %v786 = vsel %vm773, %v783, 0.0
          %787 = vadd.xlane.f32.xlu0 %v786
          %v788 = vpop.xlane.xlu0 %787
          %v789 = vsel %vm773, %v785, 0.0
          %790 = vadd.xlane.f32.xlu0 %v789
          %v791 = vpop.xlane.xlu0 %790
          %v792 = vrcp.pop %v788
          %v793 = vrcp.pop %v791
          %v794 = vmul.f32 %v783, %v792
          %v795 = vmul.f32 %v785, %v793
          %v796 = vpack.c.bf16 %v795, %v794
          %797 = vst.msk [vmem:[#allocation2] sm:$0xff] %vm773, %v796
          %v798 = vld [vmem:[%s758] sm:$0xff]
          %v799 = vld [vmem:[%s758 + $0x8] sm:$0xff]
          %v800 = vld [vmem:[#allocation4] sm:$0xf]
          %v801 = vld [vmem:[#allocation7] sm:$0x1]
          %v803 = vlaneseq
          %v804 = vshrl.u32 %v803, 7
          %v805 = vsub.s32 0, %v804
          %v806 = vrot.slane %v801, %v805
          %vm808 = vcmask 31744
          %v810 = vsel %vm808, %v798, 0
          %v813 = vsel %vm808, %v799, 0
          %vm815 = vcmask 1043456
          %v817 = vsel %vm815, %v800, 0
          %819 = vmatprep.subr.mxu0 0.0
          %820 = vmatpush1.msra.mxu0 %v817
          %821 = vmatprep.subr.mxu0 0.0
          %822 = vmatpush1.msra.mxu0 0.0
          %823 = vmatprep.subr.mxu0 0.0
          %824 = vmatpush1.msra.mxu0 0.0
          %825 = vmatprep.subr.mxu0 0.0
          %826 = vmatpush1.msra.mxu0 0.0
          %827 = vmatprep.subr.mxu0 0.0
          %828 = vmatpush1.msra.mxu0 0.0
          %829 = vmatprep.subr.mxu0 0.0
          %830 = vmatpush1.msra.mxu0 0.0
          %831 = vmatprep.subr.mxu0 0.0
          %832 = vmatpush1.msra.mxu0 0.0
          %833 = vmatprep.subr.mxu0 0.0
          %834 = vmatpush1.msra.mxu0 0.0
          %835 = vmatprep.subr.mxu0 0.0
          %836 = vmatpush1.msra.mxu0 0.0
          %837 = vmatprep.subr.mxu0 0.0
          %838 = vmatpush1.msra.mxu0 0.0
          %839 = vmatprep.subr.mxu0 0.0
          %840 = vmatpush1.msra.mxu0 0.0
          %841 = vmatprep.subr.mxu0 0.0
          %842 = vmatpush1.msra.mxu0 0.0
          %843 = vmatprep.subr.mxu0 0.0
          %844 = vmatpush1.msra.mxu0 0.0
          %845 = vmatprep.subr.mxu0 0.0
          %846 = vmatpush1.msra.mxu0 0.0
          %847 = vmatprep.subr.mxu0 0.0
          %848 = vmatpush1.msra.mxu0 0.0
          %849 = vmatprep.subr.mxu0 0.0
          %850 = vmatpush1.msra.mxu0 0.0
          %851 = vmatprep.subr.mxu0 0.0
          %852 = vmatpush1.msra.mxu0 0.0
          %853 = vmatprep.subr.mxu0 0.0
          %854 = vmatpush1.msra.mxu0 0.0
          %855 = vmatprep.subr.mxu0 0.0
          %856 = vmatpush1.msra.mxu0 0.0
          %857 = vmatprep.subr.mxu0 0.0
          %858 = vmatpush1.msra.mxu0 0.0
          %859 = vmatprep.subr.mxu0 0.0
          %860 = vmatpush1.msra.mxu0 0.0
          %861 = vmatprep.subr.mxu0 0.0
          %862 = vmatpush1.msra.mxu0 0.0
          %863 = vmatprep.subr.mxu0 0.0
          %864 = vmatpush1.msra.mxu0 0.0
          %865 = vmatprep.subr.mxu0 0.0
          %866 = vmatpush1.msra.mxu0 0.0
          %867 = vmatprep.subr.mxu0 0.0
          %868 = vmatpush1.msra.mxu0 0.0
          %869 = vmatprep.subr.mxu0 0.0
          %870 = vmatpush1.msra.mxu0 0.0
          %871 = vmatprep.subr.mxu0 0.0
          %872 = vmatpush1.msra.mxu0 0.0
          %873 = vmatprep.subr.mxu0 0.0
          %874 = vmatpush1.msra.mxu0 0.0
          %875 = vmatprep.subr.mxu0 0.0
          %876 = vmatpush1.msra.mxu0 0.0
          %877 = vmatprep.subr.mxu0 0.0
          %878 = vmatpush1.msra.mxu0 0.0
          %879 = vmatprep.subr.mxu0 0.0
          %880 = vmatpush1.msra.mxu0 0.0
          %881 = vmatprep.subr.mxu0 0.0
          %882 = vmatpush1.msra.mxu0 0.0
          %883 = vmatprep.mubr.f32.mxu0 0.0
          %884 = vmatmul.mubr.f32.gmra.mrb[0].mxu0 %v810
          %v885 = vpop.f32.mrb[0].mxu0
          %v886 = vadd.f32 %v806, %v885
          %v887 = vpop.f32.mrb[0].mxu0
          %888 = vmatprep.mubr.f32.mxu0 0.0
          %889 = vmatmul.mubr.f32.gmra.mrb[0].mxu0 %v813
          %v890 = vpop.f32.mrb[0].mxu0
          %v891 = vadd.f32 %v806, %v890
          %v892 = vpop.f32.mrb[0].mxu0
          %893 = vdwg.mxu0
          %v894 = vmax.f32 %v886, 0.0
          %v895 = vmax.f32 %v891, 0.0
          %v896 = vpack.c.bf16 %v895, %v894
          %vm897 = vcmask 130048
          %898 = vst.msk [vmem:[#allocation3] sm:$0xff] %vm897, %v896
          %v899 = vld [vmem:[#allocation9] sm:$0x1]
          %v901 = vlaneseq
          %v902 = vshrl.u32 %v901, 7
          %v903 = vsub.s32 0, %v902
          %v904 = vrot.slane %v899, %v903
          %906 = vst [vmem:[%s734] sm:$0xff] %v904
          %907 = vst [vmem:[%s734 + $0x8] sm:$0xff] %v904
        $region170: #{tpu_custom_call.1} parent=137 // pred_fallthru
          _
        %v908 = vld [vmem:[%s746] sm:$0xf]
        %v909 = vld [vmem:[%s746 + $0x4] sm:$0xf]
        %v910 = vld [vmem:[%s641] sm:$0xf]
        %v911 = vld [vmem:[%s641 + $0x4] sm:$0xf]
        %v912 = vld [vmem:[%s641 + $0x8] sm:$0xf]
        %v913 = vld [vmem:[%s641 + $0xc] sm:$0xf]
        %v914 = vld [vmem:[%s641 + $0x10] sm:$0xf]
        %v915 = vld [vmem:[%s641 + $0x14] sm:$0xf]
        %v916 = vld [vmem:[%s641 + $0x18] sm:$0xf]
        %v917 = vld [vmem:[%s641 + $0x1c] sm:$0xf]
        %v918 = vld [vmem:[#allocation2] sm:$0xff]
        %v919 = vld [vmem:[%s649] sm:$0xf]
        %vm920 = vcmask 64512
        %v922 = vsel %vm920, %v918, 0
        %vm924 = vcmask 1043456
        %v926 = vsel %vm924, %v919, 0
        %928 = vmatprep.subr.bf16.mxu0 0
        %929 = vmatpush1.bf16.msra.mxu0 %v926
        %930 = vmatprep.subr.bf16.mxu0 0
        %931 = vmatpush1.bf16.msra.mxu0 0
        %932 = vmatprep.subr.bf16.mxu0 0
        %933 = vmatpush1.bf16.msra.mxu0 0
        %934 = vmatprep.subr.bf16.mxu0 0
        %935 = vmatpush1.bf16.msra.mxu0 0
        %936 = vmatprep.subr.bf16.mxu0 0
        %937 = vmatpush1.bf16.msra.mxu0 0
        %938 = vmatprep.subr.bf16.mxu0 0
        %939 = vmatpush1.bf16.msra.mxu0 0
        %940 = vmatprep.subr.bf16.mxu0 0
        %941 = vmatpush1.bf16.msra.mxu0 0
        %942 = vmatprep.subr.bf16.mxu0 0
        %943 = vmatpush1.bf16.msra.mxu0 0
        %944 = vmatprep.subr.bf16.mxu0 0
        %945 = vmatpush1.bf16.msra.mxu0 0
        %946 = vmatprep.subr.bf16.mxu0 0
        %947 = vmatpush1.bf16.msra.mxu0 0
        %948 = vmatprep.subr.bf16.mxu0 0
        %949 = vmatpush1.bf16.msra.mxu0 0
        %950 = vmatprep.subr.bf16.mxu0 0
        %951 = vmatpush1.bf16.msra.mxu0 0
        %952 = vmatprep.subr.bf16.mxu0 0
        %953 = vmatpush1.bf16.msra.mxu0 0
        %954 = vmatprep.subr.bf16.mxu0 0
        %955 = vmatpush1.bf16.msra.mxu0 0
        %956 = vmatprep.subr.bf16.mxu0 0
        %957 = vmatpush1.bf16.msra.mxu0 0
        %958 = vmatprep.subr.bf16.mxu0 0
        %959 = vmatpush1.bf16.msra.mxu0 0
        %960 = vmatprep.mubr.bf16.mxu0 0
        %961 = vmatmul.mubr.bf16.gmra.mrb[0].mxu0 %v922
        %v962 = vpop.f32.mrb[0].mxu0
        %v963 = vadd.f32 0.0, %v962
        %v964 = vpop.f32.mrb[0].mxu0
        %v965 = vpop.f32.mrb[0].mxu0
        %v966 = vadd.f32 0.0, %v965
        %v967 = vpop.f32.mrb[0].mxu0
        %968 = vdwg.mxu0
        %v971 = vunpack.c.l.b16 %v908
        %v972 = vunpack.c.l.b16 %v909
        %v973 = vpack.c.b16 %v972, %v971
        %v982 = vunpack.c.l.b16 %v910
        %v983 = vunpack.c.l.b16 %v911
        %v984 = vunpack.c.l.b16 %v912
        %v985 = vunpack.c.l.b16 %v913
        %v986 = vunpack.c.l.b16 %v914
        %v987 = vunpack.c.l.b16 %v915
        %v988 = vunpack.c.l.b16 %v916
        %v989 = vunpack.c.l.b16 %v917
        %v990 = vpack.c.b16 %v983, %v982
        %v991 = vpack.c.b16 %v985, %v984
        %v992 = vpack.c.b16 %v987, %v986
        %v993 = vpack.c.b16 %v989, %v988
        %vm998 = vcmask 523264
        %v1000 = vsel %vm998, %v973, 0
        %1002 = vmatprep.subr.bf16.mxu0 0
        %1003 = vmatpush1.bf16.msra.mxu0 %v990
        %1004 = vmatprep.subr.bf16.mxu0 0
        %1005 = vmatpush1.bf16.msra.mxu0 %v991
        %1006 = vmatprep.subr.bf16.mxu0 0
        %1007 = vmatpush1.bf16.msra.mxu0 %v992
        %1008 = vmatprep.subr.bf16.mxu0 0
        %1009 = vmatpush1.bf16.msra.mxu0 %v993
        %1010 = vmatprep.subr.bf16.mxu0 0
        %1011 = vmatpush1.bf16.msra.mxu0 0
        %1012 = vmatprep.subr.bf16.mxu0 0
        %1013 = vmatpush1.bf16.msra.mxu0 0
        %1014 = vmatprep.subr.bf16.mxu0 0
        %1015 = vmatpush1.bf16.msra.mxu0 0
        %1016 = vmatprep.subr.bf16.mxu0 0
        %1017 = vmatpush1.bf16.msra.mxu0 0
        %1018 = vmatprep.subr.bf16.mxu0 0
        %1019 = vmatpush1.bf16.msra.mxu0 0
        %1020 = vmatprep.subr.bf16.mxu0 0
        %1021 = vmatpush1.bf16.msra.mxu0 0
        %1022 = vmatprep.subr.bf16.mxu0 0
        %1023 = vmatpush1.bf16.msra.mxu0 0
        %1024 = vmatprep.subr.bf16.mxu0 0
        %1025 = vmatpush1.bf16.msra.mxu0 0
        %1026 = vmatprep.subr.bf16.mxu0 0
        %1027 = vmatpush1.bf16.msra.mxu0 0
        %1028 = vmatprep.subr.bf16.mxu0 0
        %1029 = vmatpush1.bf16.msra.mxu0 0
        %1030 = vmatprep.subr.bf16.mxu0 0
        %1031 = vmatpush1.bf16.msra.mxu0 0
        %1032 = vmatprep.subr.bf16.mxu0 0
        %1033 = vmatpush1.bf16.msra.mxu0 0
        %1034 = vmatprep.mubr.bf16.mxu0 0
        %1035 = vmatmul.mubr.bf16.gmra.mrb[0].mxu0 %v1000
        %v1036 = vpop.f32.mrb[0].mxu0
        %v1037 = vadd.f32 %v963, %v1036
        %v1038 = vpop.f32.mrb[0].mxu0
        %v1039 = vpop.f32.mrb[0].mxu0
        %v1040 = vadd.f32 %v966, %v1039
        %v1041 = vpop.f32.mrb[0].mxu0
        %1042 = vdwg.mxu0
        %v1043 = vld [vmem:[#allocation3] sm:$0xff]
        %v1044 = vld [vmem:[%s657] sm:$0xf]
        %v1045 = vld [vmem:[%s657 + $0x4] sm:$0xf]
        %v1048 = vunpack.c.l.b16 %v1044
        %v1049 = vunpack.c.l.b16 %v1045
        %v1050 = vpack.c.b16 %v1049, %v1048
        %vm1052 = vcmask 130048
        %v1054 = vsel %vm1052, %v1043, 0
        %1056 = vmatprep.subr.bf16.mxu0 0
        %1057 = vmatpush1.bf16.msra.mxu0 %v1050
        %1058 = vmatprep.subr.bf16.mxu0 0
        %1059 = vmatpush1.bf16.msra.mxu0 0
        %1060 = vmatprep.subr.bf16.mxu0 0
        %1061 = vmatpush1.bf16.msra.mxu0 0
        %1062 = vmatprep.subr.bf16.mxu0 0
        %1063 = vmatpush1.bf16.msra.mxu0 0
        %1064 = vmatprep.subr.bf16.mxu0 0
        %1065 = vmatpush1.bf16.msra.mxu0 0
        %1066 = vmatprep.subr.bf16.mxu0 0
        %1067 = vmatpush1.bf16.msra.mxu0 0
        %1068 = vmatprep.subr.bf16.mxu0 0
        %1069 = vmatpush1.bf16.msra.mxu0 0
        %1070 = vmatprep.subr.bf16.mxu0 0
        %1071 = vmatpush1.bf16.msra.mxu0 0
        %1072 = vmatprep.subr.bf16.mxu0 0
        %1073 = vmatpush1.bf16.msra.mxu0 0
        %1074 = vmatprep.subr.bf16.mxu0 0
        %1075 = vmatpush1.bf16.msra.mxu0 0
        %1076 = vmatprep.subr.bf16.mxu0 0
        %1077 = vmatpush1.bf16.msra.mxu0 0
        %1078 = vmatprep.subr.bf16.mxu0 0
        %1079 = vmatpush1.bf16.msra.mxu0 0
        %1080 = vmatprep.subr.bf16.mxu0 0
        %1081 = vmatpush1.bf16.msra.mxu0 0
        %1082 = vmatprep.subr.bf16.mxu0 0
        %1083 = vmatpush1.bf16.msra.mxu0 0
        %1084 = vmatprep.subr.bf16.mxu0 0
        %1085 = vmatpush1.bf16.msra.mxu0 0
        %1086 = vmatprep.subr.bf16.mxu0 0
        %1087 = vmatpush1.bf16.msra.mxu0 0
        %1088 = vmatprep.mubr.bf16.mxu0 0
        %1089 = vmatmul.mubr.bf16.gmra.mrb[0].mxu0 %v1054
        %v1090 = vpop.f32.mrb[0].mxu0
        %v1091 = vadd.f32 0.0, %v1090
        %v1092 = vpop.f32.mrb[0].mxu0
        %v1093 = vpop.f32.mrb[0].mxu0
        %v1094 = vadd.f32 0.0, %v1093
        %v1095 = vpop.f32.mrb[0].mxu0
        %1096 = vdwg.mxu0
        %v1097 = vadd.f32 %v1037, %v1091
        %v1098 = vadd.f32 %v1040, %v1094
        %v1099 = vld [vmem:[%s762] sm:$0x1]
        %v1101 = vlaneseq
        %v1102 = vshrl.u32 %v1101, 7
        %v1103 = vsub.s32 0, %v1102
        %v1104 = vrot.slane %v1099, %v1103
        %v1106 = vadd.f32 %v1097, %v1104
        %v1107 = vadd.f32 %v1098, %v1104
        %v1108 = vmax.f32 %v1106, 0.0
        %v1109 = vmax.f32 %v1107, 0.0
        %v1110 = vpack.c.bf16 %v1109, %v1108
        %v1112 = vunpack.c.l.b16 %v1110
        %v1113 = vunpack.c.h.b16 %v1110
        %v1114 = vpack.c.b16 %v1112, %v1112
        %v1115 = vpack.c.b16 %v1113, %v1113
        %1118 = vst [vmem:[%s741] sm:$0xf] %v1114
        %1119 = vst [vmem:[%s741 + $0x4] sm:$0xf] %v1115
        %v1120 = vld [vmem:[%s734] sm:$0xff]
        %v1121 = vld [vmem:[%s734 + $0x8] sm:$0xff]
        %v1122 = vld [vmem:[%s665] sm:$0xf]
        %v1123 = vld [vmem:[%s665 + $0x4] sm:$0xf]
        %v1124 = vld [vmem:[%s665 + $0x8] sm:$0xf]
        %v1125 = vld [vmem:[%s665 + $0xc] sm:$0xf]
        %v1126 = vld [vmem:[%s665 + $0x10] sm:$0xf]
        %v1127 = vld [vmem:[%s665 + $0x14] sm:$0xf]
        %v1128 = vld [vmem:[%s665 + $0x18] sm:$0xf]
        %v1129 = vld [vmem:[%s665 + $0x1c] sm:$0xf]
        %v1130 = vld [vmem:[%s665 + $0x20] sm:$0xf]
        %v1131 = vld [vmem:[%s665 + $0x24] sm:$0xf]
        %v1132 = vld [vmem:[%s665 + $0x28] sm:$0xf]
        %v1133 = vld [vmem:[%s665 + $0x2c] sm:$0xf]
        %v1134 = vld [vmem:[%s665 + $0x30] sm:$0xf]
        %v1135 = vld [vmem:[%s665 + $0x34] sm:$0xf]
        %v1136 = vld [vmem:[%s665 + $0x38] sm:$0xf]
        %v1137 = vld [vmem:[%s665 + $0x3c] sm:$0xf]
        %v1154 = vunpack.c.l.b16 %v1122
        %v1155 = vunpack.c.l.b16 %v1123
        %v1156 = vunpack.c.l.b16 %v1124
        %v1157 = vunpack.c.l.b16 %v1125
        %v1158 = vunpack.c.l.b16 %v1126
        %v1159 = vunpack.c.l.b16 %v1127
        %v1160 = vunpack.c.l.b16 %v1128
        %v1161 = vunpack.c.l.b16 %v1129
        %v1162 = vunpack.c.l.b16 %v1130
        %v1163 = vunpack.c.l.b16 %v1131
        %v1164 = vunpack.c.l.b16 %v1132
        %v1165 = vunpack.c.l.b16 %v1133
        %v1166 = vunpack.c.l.b16 %v1134
        %v1167 = vunpack.c.l.b16 %v1135
        %v1168 = vunpack.c.l.b16 %v1136
        %v1169 = vunpack.c.l.b16 %v1137
        %v1170 = vpack.c.b16 %v1155, %v1154
        %v1171 = vpack.c.b16 %v1157, %v1156
        %v1172 = vpack.c.b16 %v1159, %v1158
        %v1173 = vpack.c.b16 %v1161, %v1160
        %v1174 = vpack.c.b16 %v1163, %v1162
        %v1175 = vpack.c.b16 %v1165, %v1164
        %v1176 = vpack.c.b16 %v1167, %v1166
        %v1177 = vpack.c.b16 %v1169, %v1168
        %1186 = vmatprep.subr.bf16.mxu0 0
        %1187 = vmatpush1.bf16.msra.mxu0 %v1170
        %1188 = vmatprep.subr.bf16.mxu0 0
        %1189 = vmatpush1.bf16.msra.mxu0 %v1171
        %1190 = vmatprep.subr.bf16.mxu0 0
        %1191 = vmatpush1.bf16.msra.mxu0 %v1172
        %1192 = vmatprep.subr.bf16.mxu0 0
        %1193 = vmatpush1.bf16.msra.mxu0 %v1173
        %1194 = vmatprep.subr.bf16.mxu0 0
        %1195 = vmatpush1.bf16.msra.mxu0 %v1174
        %1196 = vmatprep.subr.bf16.mxu0 0
        %1197 = vmatpush1.bf16.msra.mxu0 %v1175
        %1198 = vmatprep.subr.bf16.mxu0 0
        %1199 = vmatpush1.bf16.msra.mxu0 %v1176
        %1200 = vmatprep.subr.bf16.mxu0 0
        %1201 = vmatpush1.bf16.msra.mxu0 %v1177
        %1202 = vmatprep.subr.bf16.mxu0 0
        %1203 = vmatpush1.bf16.msra.mxu0 0
        %1204 = vmatprep.subr.bf16.mxu0 0
        %1205 = vmatpush1.bf16.msra.mxu0 0
        %1206 = vmatprep.subr.bf16.mxu0 0
        %1207 = vmatpush1.bf16.msra.mxu0 0
        %1208 = vmatprep.subr.bf16.mxu0 0
        %1209 = vmatpush1.bf16.msra.mxu0 0
        %1210 = vmatprep.subr.bf16.mxu0 0
        %1211 = vmatpush1.bf16.msra.mxu0 0
        %1212 = vmatprep.subr.bf16.mxu0 0
        %1213 = vmatpush1.bf16.msra.mxu0 0
        %1214 = vmatprep.subr.bf16.mxu0 0
        %1215 = vmatpush1.bf16.msra.mxu0 0
        %1216 = vmatprep.subr.bf16.mxu0 0
        %1217 = vmatpush1.bf16.msra.mxu0 0
        %1218 = vmatprep.mubr.bf16.mxu0 0
        %1219 = vmatmul.mubr.bf16.gmra.mrb[0].mxu0 %v1110
        %v1220 = vpop.f32.mrb[0].mxu0
        %v1221 = vadd.f32 0.0, %v1220
        %v1222 = vpop.f32.mrb[0].mxu0
        %v1223 = vpop.f32.mrb[0].mxu0
        %v1224 = vadd.f32 0.0, %v1223
        %v1225 = vpop.f32.mrb[0].mxu0
        %1226 = vdwg.mxu0
        %v1227 = vadd.f32 %v1120, %v1221
        %v1228 = vadd.f32 %v1121, %v1224
        %1229 = vst [vmem:[%s734] sm:$0xff] %v1227
        %1230 = vst [vmem:[%s734 + $0x8] sm:$0xff] %v1228
        %s1231 = sand.u32 %s326, 1
        %s1232 = scalar_lea.sflag [#allocation6], %s1231
        %s1233 = sand.u32 %s326, 1
        %s1234 = smul.addr %s1233, 16
        %s1235 = scalar_lea.vmem [#allocation15], %s1234
        %s1236 = sand.u32 %s354, 1
        %s1237 = scalar_lea.sflag [#allocation17], %s1236
        %s1238 = sand.u32 %s354, 1
        %s1239 = smul.addr %s1238, 8
        %s1240 = scalar_lea.vmem [#allocation16], %s1239
        // Predicated region
        $region171: #{tpu_custom_call.1} parent=137 // pred_check
          %p1241 = pneg %p336
        $region172: #{tpu_custom_call.1} parent=137 // pred_check_branch
          %1243 = sbr.rel (%p1241) target = $region174
        $region173: #{tpu_custom_call.1} parent=137 // pred_region
          %s1244 = smul.u32 2, %s39
          %s1246 = ssub.s32 256, 256
          %1247 = vsyncadd %s1232, %s1246
          %s1248 = smul.addr %s1244, 128
          %s1249 = scalar_lea.hbm %s11, %s1248
          %s1250 = sshll.u32 %s1235, 4
          %s1251 = int_to_ptr.vmem [resolvable:$true] %s1250
          %1256 = dma.vmem_to_hbm [thread:$0]  %s1251, 256, %s1249, %s1232, 128, 128, 8
        $region174: #{tpu_custom_call.1} parent=137 // pred_fallthru
          _
        // Predicated region
        $region175: #{tpu_custom_call.1} parent=137 // pred_check
          %p1257 = pneg %p364
        $region176: #{tpu_custom_call.1} parent=137 // pred_check_branch
          %1259 = sbr.rel (%p1257) target = $region178
        $region177: #{tpu_custom_call.1} parent=137 // pred_region
          %s1260 = smul.u32 2, %s39
          %s1262 = ssub.s32 128, 128
          %1263 = vsyncadd %s1237, %s1262
          %s1264 = smul.addr %s1260, 2
          %s1265 = sadd.s32 %s40, %s1264
          %s1266 = smul.addr %s1265, 64
          %s1267 = scalar_lea.hbm %s12, %s1266
          %s1268 = sshll.u32 %s1240, 4
          %s1269 = int_to_ptr.vmem [resolvable:$true] %s1268
          %1274 = dma.vmem_to_hbm [thread:$0]  %s1269, 128, %s1267, %s1237, 64, 128, 4
        $region178: #{tpu_custom_call.1} parent=137 // pred_fallthru
          _
      $region138: #{tpu_custom_call.1} parent=5 // pred_fallthru
        _
      %p1275 = scmp.le.s32.totalorder 2, %s30
      // Predicated region
      $region179: #{tpu_custom_call.1} parent=5 // pred_check
        %p1276 = pneg %p1275
      $region180: #{tpu_custom_call.1} parent=5 // pred_check_branch
        %1278 = sbr.rel (%p1276) target = $region182
      $region181: #{tpu_custom_call.1} parent=5 // pred_region
        %s1279 = ssub.s32 %s30, 2
        // Predicated region
        $region183: #{tpu_custom_call.1} parent=181 // pred_check
          %p1280 = pneg %p342
        $region184: #{tpu_custom_call.1} parent=181 // pred_check_branch
          %1282 = sbr.rel (%p1280) target = $region186
        $region185: #{tpu_custom_call.1} parent=181 // pred_region
          %s1283 = sand.u32 %s327, 1
          %s1284 = scalar_lea.sflag [#allocation6], %s1283
          %s1285 = sand.u32 %s327, 1
          %s1286 = smul.addr %s1285, 16
          %s1287 = scalar_lea.vmem [#allocation15], %s1286
          %1288 = dma.done %s1284, 256
        $region186: #{tpu_custom_call.1} parent=181 // pred_fallthru
          _
        // Predicated region
        $region187: #{tpu_custom_call.1} parent=181 // pred_check
          %p1289 = pneg %p370
        $region188: #{tpu_custom_call.1} parent=181 // pred_check_branch
          %1291 = sbr.rel (%p1289) target = $region190
        $region189: #{tpu_custom_call.1} parent=181 // pred_region
          %s1292 = sand.u32 %s355, 1
          %s1293 = scalar_lea.sflag [#allocation17], %s1292
          %s1294 = sand.u32 %s355, 1
          %s1295 = smul.addr %s1294, 8
          %s1296 = scalar_lea.vmem [#allocation16], %s1295
          %1297 = dma.done %s1293, 128
        $region190: #{tpu_custom_call.1} parent=181 // pred_fallthru
          _
      $region182: #{tpu_custom_call.1} parent=5 // pred_fallthru
        _
    $region6: #{tpu_custom_call.1} parent=1 // loop_footer
      %s34 = sadd.s32 1, %s30
    $region7: #{tpu_custom_call.1} parent=1 // loop_footer_branch
      %29 = sbr.rel target = $region3
    $region8: #{tpu_custom_call.1} parent=1 // loop_exit
      _
    %1298 = vsyncpa [#allocation5], 1
    %s1299 = scalar_lea.sflag [#allocation5], 1
    %1300 = vsyncpa %s1299, 1
    %1301 = vsyncpa [#allocation8], 1
    %1302 = vsyncpa [#allocation12], 1
    %s1303 = scalar_lea.sflag [#allocation12], 1
    %1304 = vsyncpa %s1303, 1
    %1305 = vsyncpa [#allocation6], 1
    %s1306 = scalar_lea.sflag [#allocation6], 1
    %1307 = vsyncpa %s1306, 1
    %1308 = vsyncpa [#allocation17], 1
    %s1309 = scalar_lea.sflag [#allocation17], 1
    %1310 = vsyncpa %s1309, 1

</llo_original>
